<compile_context>
chip_gen: v6e
topology: v6e:2x2x1
jax: 0.10.0
libtpu: 0.0.40
codegen_flags: <defaults>
</compile_context>

<pallas_src>
import functools
import math

import jax
import jax.numpy as jnp
from jax.experimental import pallas as pl
from jax.experimental.pallas import tpu as pltpu


# ----------------------------- Pallas kernels ------------------------------

def _attn_sublayer_kernel(xq_ref, xf_ref, wq_ref, bq_ref, wkv_ref, bkv_ref,
                          wo_ref, bo_ref, g_ref, beta_ref, o_ref, attn_ref,
                          *, num_heads, heads_per_group, scale, eps):
    """Fused self-attention sub-layer for one (batch, q-row-tile) grid step.

    xq_ref: (1, tq, D) q-rows (also the residual); xf_ref: (1, S, D) full seq
    for K/V.  out: layer_norm(xq + MHA(xq, xf, xf) @ Wo + bo), shape (1, tq, D).
    """
    f32 = jnp.float32
    bf16 = jnp.bfloat16
    xq = xq_ref[0]                                   # (tq, D) f32
    xf = xf_ref[0]                                   # (S, D)  f32
    d_model = xq.shape[-1]
    dh = d_model // num_heads

    # Projections: bf16 MXU operands, f32 accumulation.
    q = jnp.dot(xq.astype(bf16), wq_ref[...],
                preferred_element_type=f32) + bq_ref[...]
    q = (q * scale).astype(bf16)                     # scale folded in once
    kv = jnp.dot(xf.astype(bf16), wkv_ref[...],
                 preferred_element_type=f32) + bkv_ref[...]
    k = kv[:, :d_model].astype(bf16)                 # (S, D)
    v = kv[:, d_model:].astype(bf16)                 # (S, D)

    # Per-head attention.  Heads are processed in lane-aligned groups and each
    # group's context is stored straight into a bf16 VMEM scratch.
    for g0 in range(0, num_heads, heads_per_group):  # static trip count
        ctx = []
        for h in range(g0, g0 + heads_per_group):
            sl = slice(h * dh, (h + 1) * dh)
            # contraction over the last dim of both operands -> no k.T copy
            s = jax.lax.dot_general(
                q[:, sl], k[:, sl], (((1,), (1,)), ((), ())),
                preferred_element_type=f32)          # (tq, S) f32
            # TODO(synk): additive attention mask hook would be applied here.
            s = s - jnp.max(s, axis=-1, keepdims=True)
            p = jnp.exp(s)
            denom = jnp.sum(p, axis=-1, keepdims=True)
            c = jnp.dot(p.astype(bf16), v[:, sl],
                        preferred_element_type=f32)  # (tq, dh) f32
            # exact normalization applied to the small context, not the (tq,S)
            # probability block (saves two full (tq,S) VPU multiplies per head)
            ctx.append(c / denom)
        grp = ctx[0] if len(ctx) == 1 else jnp.concatenate(ctx, axis=-1)
        attn_ref[:, g0 * dh:(g0 + heads_per_group) * dh] = grp.astype(bf16)

    # Output projection + residual + LayerNorm epilogue (f32 math, in VMEM).
    y = jnp.dot(attn_ref[...], wo_ref[...],
                preferred_element_type=f32) + bo_ref[...]
    y = y + xq
    mean = jnp.mean(y, axis=-1, keepdims=True)
    var = jnp.mean((y - mean) ** 2, axis=-1, keepdims=True)
    o_ref[0] = (y - mean) * jax.lax.rsqrt(var + eps) * g_ref[...] + beta_ref[...]


def _ffn_sublayer_kernel(x_ref, w1_ref, b1_ref, w2_ref, b2_ref,
                         g_ref, beta_ref, o_ref, *, eps):
    """Fused FFN sub-layer on a (row_tile, D) block:
       out = layer_norm(x + relu(x @ W1 + b1) @ W2 + b2)."""
    f32 = jnp.float32
    bf16 = jnp.bfloat16
    x = x_ref[...]                                   # (row_tile, D) f32
    h = jnp.dot(x.astype(bf16), w1_ref[...],
                preferred_element_type=f32) + b1_ref[...]
    h = jnp.maximum(h, 0.0)
    y = jnp.dot(h.astype(bf16), w2_ref[...],
                preferred_element_type=f32) + b2_ref[...]
    y = y + x
    mean = jnp.mean(y, axis=-1, keepdims=True)
    var = jnp.mean((y - mean) ** 2, axis=-1, keepdims=True)
    o_ref[...] = (y - mean) * jax.lax.rsqrt(var + eps) * g_ref[...] + beta_ref[...]


# ------------------------------ helpers --------------------------------------

def _pick_q_tile(seq_len):
    """q-row tile: full S if small, else largest of (512,256,128) dividing S."""
    if seq_len <= 512:
        return seq_len
    for t in (512, 256, 128):
        if seq_len % t == 0:
            return t
    return seq_len  # TODO(synk): pad S to a multiple of 128 for long ragged S


def _pick_row_tile(n_rows, d_model, d_ff, budget_bytes=8 << 20):
    """Largest row tile (multiple of 8, dividing n_rows) whose live f32
    activations (hidden (t, Dff) + double-buffered x/out tiles) fit a budget."""
    candidates = [t for t in (512, 256, 128, 64, 32, 16, 8) if n_rows % t == 0]
    if not candidates:
        return n_rows  # TODO(synk): pad rows to a multiple of 8
    for t in candidates:                              # largest first
        if t * d_ff * 4 + 4 * t * d_model * 4 <= budget_bytes:
            return t
    return candidates[-1]


def _head_group(num_heads, dh):
    """Heads per group so each scratch write spans >=128 lanes when possible."""
    if dh >= 128 or (128 % dh) != 0:
        return 1
    g = min(num_heads, 128 // dh)
    while num_heads % g != 0:
        g -= 1
    return max(g, 1)


# ------------------------------ JAX wrappers --------------------------------

def attention_sublayer(x, p, num_heads, eps=1e-5):
    B, S, D = x.shape
    dh = D // num_heads
    scale = 1.0 / math.sqrt(dh)
    tq = _pick_q_tile(S)
    n_qt = S // tq
    heads_per_group = _head_group(num_heads, dh)

    kernel = functools.partial(
        _attn_sublayer_kernel, num_heads=num_heads,
        heads_per_group=heads_per_group, scale=scale, eps=eps)

    # VMEM footprint (bytes), including Pallas' 2x double-buffering of blocks.
    footprint = 2 * (tq * D * 4 + S * D * 4              # xq, x_full
                     + D * D * 2 + D * 2 * D * 2 + D * D * 2  # Wq, Wkv, Wo (bf16)
                     + tq * D * 4)                        # out
    footprint += tq * D * 2                               # attn scratch (bf16)
    footprint += tq * 3 * D * 4 + 2 * tq * S * 4          # q/kv + score headroom
    vmem_limit = int(min(64 << 20, max(2 * footprint, 8 << 20)))

    cost = pl.CostEstimate(
        flops=int(B * n_qt * (2 * tq * D * D        # q proj
                              + 4 * S * D * D       # kv proj
                              + 4 * num_heads * tq * S * dh  # scores + pv
                              + 2 * tq * D * D)),   # o proj
        transcendentals=int(B * n_qt * num_heads * tq * S),
        bytes_accessed=int(B * (n_qt + 1) * S * D * 4 + B * S * D * 4
                           + 4 * D * D * 2))

    return pl.pallas_call(
        kernel,
        out_shape=jax.ShapeDtypeStruct((B, S, D), jnp.float32),
        grid=(B, n_qt),
        in_specs=[
            pl.BlockSpec((1, tq, D), lambda b, qi: (b, qi, 0)),   # x (q rows)
            pl.BlockSpec((1, S, D), lambda b, qi: (b, 0, 0)),     # x (full, K/V)
            pl.BlockSpec((D, D), lambda b, qi: (0, 0)),           # Wq (resident)
            pl.BlockSpec((1, D), lambda b, qi: (0, 0)),           # bq
            pl.BlockSpec((D, 2 * D), lambda b, qi: (0, 0)),       # Wkv (resident)
            pl.BlockSpec((1, 2 * D), lambda b, qi: (0, 0)),       # bkv
            pl.BlockSpec((D, D), lambda b, qi: (0, 0)),           # Wo (resident)
            pl.BlockSpec((1, D), lambda b, qi: (0, 0)),           # bo
            pl.BlockSpec((1, D), lambda b, qi: (0, 0)),           # gamma1
            pl.BlockSpec((1, D), lambda b, qi: (0, 0)),           # beta1
        ],
        out_specs=pl.BlockSpec((1, tq, D), lambda b, qi: (b, qi, 0)),
        scratch_shapes=[pltpu.VMEM((tq, D), jnp.bfloat16)],
        compiler_params=pltpu.CompilerParams(
            dimension_semantics=("parallel", "parallel"),
            vmem_limit_bytes=vmem_limit),
        cost_estimate=cost,
    )(x, x, p["wq"], p["bq"], p["wkv"], p["bkv"], p["wo"], p["bo"],
      p["gamma1"], p["beta1"])


def ffn_sublayer(x, p, eps=1e-5):
    B, S, D = x.shape
    N = B * S
    Dff = p["w1"].shape[1]
    row_tile = _pick_row_tile(N, D, Dff)

    footprint = 2 * (row_tile * D * 4 + D * Dff * 2 + Dff * D * 2
                     + row_tile * D * 4)
    footprint += 2 * row_tile * Dff * 4                   # hidden act headroom
    vmem_limit = int(min(64 << 20, max(2 * footprint, 8 << 20)))

    cost = pl.CostEstimate(
        flops=int(4 * N * D * Dff),
        transcendentals=0,
        bytes_accessed=int(2 * N * D * 4 + 2 * D * Dff * 2))

    out = pl.pallas_call(
        functools.partial(_ffn_sublayer_kernel, eps=eps),
        out_shape=jax.ShapeDtypeStruct((N, D), jnp.float32),
        grid=(N // row_tile,),
        in_specs=[
            pl.BlockSpec((row_tile, D), lambda i: (i, 0)),        # x rows
            pl.BlockSpec((D, Dff), lambda i: (0, 0)),             # W1 (resident)
            pl.BlockSpec((1, Dff), lambda i: (0, 0)),             # b1
            pl.BlockSpec((Dff, D), lambda i: (0, 0)),             # W2 (resident)
            pl.BlockSpec((1, D), lambda i: (0, 0)),               # b2
            pl.BlockSpec((1, D), lambda i: (0, 0)),                # gamma2
            pl.BlockSpec((1, D), lambda i: (0, 0)),                # beta2
        ],
        out_specs=pl.BlockSpec((row_tile, D), lambda i: (i, 0)),
        compiler_params=pltpu.CompilerParams(
            dimension_semantics=("parallel",),
            vmem_limit_bytes=vmem_limit),
        cost_estimate=cost,
    )(x.reshape(N, D), p["w1"], p["b1"], p["w2"], p["b2"],
      p["gamma2"], p["beta2"])
    return out.reshape(B, S, D)


@functools.partial(jax.jit, static_argnames=("num_heads",))
def boring_encoder_block(x, prepared_params, num_heads):
    """Matches BoringEncoderBlock.forward (mask=None, padding=False, eval)."""
    x = attention_sublayer(x, prepared_params, num_heads)  # MHA + drop1(id) + LN1
    x = ffn_sublayer(x, prepared_params)                   # FFN + drop2(id) + LN2
    return x


# ---------------------------- parameter setup -------------------------------

def init_params(key, d_model, d_ff):
    keys = jax.random.split(key, 6)
    s = 0.02
    return {
        # multi-head self-attention
        "wq": s * jax.random.normal(keys[0], (d_model, d_model), jnp.float32),
        "bq": jnp.zeros((d_model,), jnp.float32),
        "wk": s * jax.random.normal(keys[1], (d_model, d_model), jnp.float32),
        "bk": jnp.zeros((d_model,), jnp.float32),
        "wv": s * jax.random.normal(keys[2], (d_model, d_model), jnp.float32),
        "bv": jnp.zeros((d_model,), jnp.float32),
        "wo": s * jax.random.normal(keys[3], (d_model, d_model), jnp.float32),
        "bo": jnp.zeros((d_model,), jnp.float32),
        # layer norms
        "gamma1": jnp.ones((d_model,), jnp.float32),
        "beta1": jnp.zeros((d_model,), jnp.float32),
        "gamma2": jnp.ones((d_model,), jnp.float32),
        "beta2": jnp.zeros((d_model,), jnp.float32),
        # feed-forward
        "w1": s * jax.random.normal(keys[4], (d_model, d_ff), jnp.float32),
        "b1": jnp.zeros((d_ff,), jnp.float32),
        "w2": s * jax.random.normal(keys[5], (d_ff, d_model), jnp.float32),
        "b2": jnp.zeros((d_model,), jnp.float32),
    }


def prepare_params(p):
    """One-time weight prep: fuse K/V projection, cast MXU weights to bf16,
    reshape biases / LN params to (1, D) rows.  Done once, not per forward."""
    d_model = p["wq"].shape[0]
    d_ff = p["w1"].shape[1]
    return {
        "wq": p["wq"].astype(jnp.bfloat16),
        "bq": p["bq"].reshape(1, d_model),
        "wkv": jnp.concatenate([p["wk"], p["wv"]], axis=1).astype(jnp.bfloat16),
        "bkv": jnp.concatenate([p["bk"], p["bv"]], axis=0).reshape(1, 2 * d_model),
        "wo": p["wo"].astype(jnp.bfloat16),
        "bo": p["bo"].reshape(1, d_model),
        "gamma1": p["gamma1"].reshape(1, d_model),
        "beta1": p["beta1"].reshape(1, d_model),
        "w1": p["w1"].astype(jnp.bfloat16),
        "b1": p["b1"].reshape(1, d_ff),
        "w2": p["w2"].astype(jnp.bfloat16),
        "b2": p["b2"].reshape(1, d_model),
        "gamma2": p["gamma2"].reshape(1, d_model),
        "beta2": p["beta2"].reshape(1, d_model),
    }


# --------------------------------- main --------------------------------------

if __name__ == "__main__":
    B, S, D, H, DFF = 2, 8, 32, 4, 64

    key = jax.random.PRNGKey(0)
    kx, kp = jax.random.split(key, 2)

    x = jax.random.normal(kx, (B, S, D), jnp.float32)
    params = prepare_params(init_params(kp, D, DFF))

    out = boring_encoder_block(x, params, num_heads=H)
    jax.block_until_ready(out)

    assert out.shape == (B, S, D)
    assert bool(jnp.all(jnp.isfinite(out)))
    print("KERNEL_OK")
</pallas_src>

<mosaic_0001>
module attributes {stable_mosaic.version = 11 : i64} {
  func.func @_ffn_sublayer_kernel(%arg0: i32, %arg1: memref<16x32xf32, #tpu.memory_space<vmem>>, %arg2: memref<32x64xbf16, #tpu.memory_space<vmem>>, %arg3: memref<1x64xf32, #tpu.memory_space<vmem>>, %arg4: memref<64x32xbf16, #tpu.memory_space<vmem>>, %arg5: memref<1x32xf32, #tpu.memory_space<vmem>>, %arg6: memref<1x32xf32, #tpu.memory_space<vmem>>, %arg7: memref<1x32xf32, #tpu.memory_space<vmem>>, %arg8: memref<16x32xf32, #tpu.memory_space<vmem>>) attributes {dimension_semantics = [#tpu.dimension_semantics<parallel>], iteration_bounds = array<i64: 1>, scalar_prefetch = 0 : i64, scratch_operands = 0 : i64, tpu.core_type = #tpu.core_type<tc>, window_params = [{transform_indices = @transform_0, window_bounds = array<i64: 16, 32>}, {pipeline_mode = #tpu.pipeline_mode<synchronous>, transform_indices = @transform_1, window_bounds = array<i64: 32, 64>}, {pipeline_mode = #tpu.pipeline_mode<synchronous>, transform_indices = @transform_2, window_bounds = array<i64: 1, 64>}, {pipeline_mode = #tpu.pipeline_mode<synchronous>, transform_indices = @transform_3, window_bounds = array<i64: 64, 32>}, {pipeline_mode = #tpu.pipeline_mode<synchronous>, transform_indices = @transform_4, window_bounds = array<i64: 1, 32>}, {pipeline_mode = #tpu.pipeline_mode<synchronous>, transform_indices = @transform_5, window_bounds = array<i64: 1, 32>}, {pipeline_mode = #tpu.pipeline_mode<synchronous>, transform_indices = @transform_6, window_bounds = array<i64: 1, 32>}, {transform_indices = @transform_7, window_bounds = array<i64: 16, 32>}]} {
    %c0 = arith.constant 0 : index
    %c0_0 = arith.constant 0 : index
    %0 = vector.load %arg1[%c0, %c0_0] : memref<16x32xf32, #tpu.memory_space<vmem>>, vector<16x32xf32>
    %1 = arith.truncf %0 : vector<16x32xf32> to vector<16x32xbf16>
    %c0_1 = arith.constant 0 : index
    %c0_2 = arith.constant 0 : index
    %2 = vector.load %arg2[%c0_1, %c0_2] : memref<32x64xbf16, #tpu.memory_space<vmem>>, vector<32x64xbf16>
    %cst = arith.constant dense<0.000000e+00> : vector<16x64xf32>
    %3 = tpu.matmul %1, %2, %cst {dimension_numbers = #tpu.dot_dimension_numbers<[1], [0], [0], [1], [0, 0, 1, 1], [], []>} : vector<16x32xbf16>, vector<32x64xbf16>, vector<16x64xf32> -> vector<16x64xf32>
    %c0_3 = arith.constant 0 : index
    %c0_4 = arith.constant 0 : index
    %4 = vector.load %arg3[%c0_3, %c0_4] : memref<1x64xf32, #tpu.memory_space<vmem>>, vector<1x64xf32>
    %5 = vector.broadcast %4 : vector<1x64xf32> to vector<16x64xf32>
    %6 = arith.addf %3, %5 : vector<16x64xf32>
    %cst_5 = arith.constant 0.000000e+00 : f32
    %7 = vector.broadcast %cst_5 : f32 to vector<16x64xf32>
    %8 = arith.maximumf %6, %7 : vector<16x64xf32>
    %9 = arith.truncf %8 : vector<16x64xf32> to vector<16x64xbf16>
    %c0_6 = arith.constant 0 : index
    %c0_7 = arith.constant 0 : index
    %10 = vector.load %arg4[%c0_6, %c0_7] : memref<64x32xbf16, #tpu.memory_space<vmem>>, vector<64x32xbf16>
    %cst_8 = arith.constant dense<0.000000e+00> : vector<16x32xf32>
    %11 = tpu.matmul %9, %10, %cst_8 {dimension_numbers = #tpu.dot_dimension_numbers<[1], [0], [0], [1], [0, 0, 1, 1], [], []>} : vector<16x64xbf16>, vector<64x32xbf16>, vector<16x32xf32> -> vector<16x32xf32>
    %c0_9 = arith.constant 0 : index
    %c0_10 = arith.constant 0 : index
    %12 = vector.load %arg5[%c0_9, %c0_10] : memref<1x32xf32, #tpu.memory_space<vmem>>, vector<1x32xf32>
    %13 = vector.broadcast %12 : vector<1x32xf32> to vector<16x32xf32>
    %14 = arith.addf %11, %13 : vector<16x32xf32>
    %15 = arith.addf %14, %0 : vector<16x32xf32>
    %cst_11 = arith.constant dense<0.000000e+00> : vector<16xf32>
    %16 = vector.multi_reduction <add>, %15, %cst_11 [1] : vector<16x32xf32> to vector<16xf32>
    %17 = vector.shape_cast %16 : vector<16xf32> to vector<16x1xf32>
    %cst_12 = arith.constant 3.200000e+01 : f32
    %18 = vector.broadcast %cst_12 : f32 to vector<16x1xf32>
    %19 = arith.divf %17, %18 : vector<16x1xf32>
    %20 = vector.broadcast %19 : vector<16x1xf32> to vector<16x32xf32>
    %21 = arith.subf %15, %20 : vector<16x32xf32>
    %22 = arith.mulf %21, %21 : vector<16x32xf32>
    %cst_13 = arith.constant dense<0.000000e+00> : vector<16xf32>
    %23 = vector.multi_reduction <add>, %22, %cst_13 [1] : vector<16x32xf32> to vector<16xf32>
    %24 = vector.shape_cast %23 : vector<16xf32> to vector<16x1xf32>
    %cst_14 = arith.constant 3.200000e+01 : f32
    %25 = vector.broadcast %cst_14 : f32 to vector<16x1xf32>
    %26 = arith.divf %24, %25 : vector<16x1xf32>
    %27 = vector.broadcast %19 : vector<16x1xf32> to vector<16x32xf32>
    %28 = arith.subf %15, %27 : vector<16x32xf32>
    %cst_15 = arith.constant 9.99999974E-6 : f32
    %29 = vector.broadcast %cst_15 : f32 to vector<16x1xf32>
    %30 = arith.addf %26, %29 : vector<16x1xf32>
    %31 = math.rsqrt %30 : vector<16x1xf32>
    %32 = vector.broadcast %31 : vector<16x1xf32> to vector<16x32xf32>
    %33 = arith.mulf %28, %32 : vector<16x32xf32>
    %c0_16 = arith.constant 0 : index
    %c0_17 = arith.constant 0 : index
    %34 = vector.load %arg6[%c0_16, %c0_17] : memref<1x32xf32, #tpu.memory_space<vmem>>, vector<1x32xf32>
    %35 = vector.broadcast %34 : vector<1x32xf32> to vector<16x32xf32>
    %36 = arith.mulf %33, %35 : vector<16x32xf32>
    %c0_18 = arith.constant 0 : index
    %c0_19 = arith.constant 0 : index
    %37 = vector.load %arg7[%c0_18, %c0_19] : memref<1x32xf32, #tpu.memory_space<vmem>>, vector<1x32xf32>
    %38 = vector.broadcast %37 : vector<1x32xf32> to vector<16x32xf32>
    %39 = arith.addf %36, %38 : vector<16x32xf32>
    %c0_20 = arith.constant 0 : index
    %c0_21 = arith.constant 0 : index
    %40 = vector.load %arg8[%c0_20, %c0_21] : memref<16x32xf32, #tpu.memory_space<vmem>>, vector<16x32xf32>
    tpu.vector_store %arg8[%c0_20, %c0_21], %39 {strides = array<i32>} : memref<16x32xf32, #tpu.memory_space<vmem>>, vector<16x32xf32>,
    return
  }
  func.func @transform_0(%arg0: i32) -> (i32, i32) {
    %c0_i32 = arith.constant 0 : i32
    %c0_i32_0 = arith.constant 0 : i32
    return %arg0, %c0_i32 : i32, i32
  }
  func.func @transform_1(%arg0: i32) -> (i32, i32) {
    %c0_i32 = arith.constant 0 : i32
    %c0_i32_0 = arith.constant 0 : i32
    %c0_i32_1 = arith.constant 0 : i32
    return %c0_i32, %c0_i32_0 : i32, i32
  }
  func.func @transform_2(%arg0: i32) -> (i32, i32) {
    %c0_i32 = arith.constant 0 : i32
    %c0_i32_0 = arith.constant 0 : i32
    %c0_i32_1 = arith.constant 0 : i32
    return %c0_i32, %c0_i32_0 : i32, i32
  }
  func.func @transform_3(%arg0: i32) -> (i32, i32) {
    %c0_i32 = arith.constant 0 : i32
    %c0_i32_0 = arith.constant 0 : i32
    %c0_i32_1 = arith.constant 0 : i32
    return %c0_i32, %c0_i32_0 : i32, i32
  }
  func.func @transform_4(%arg0: i32) -> (i32, i32) {
    %c0_i32 = arith.constant 0 : i32
    %c0_i32_0 = arith.constant 0 : i32
    %c0_i32_1 = arith.constant 0 : i32
    return %c0_i32, %c0_i32_0 : i32, i32
  }
  func.func @transform_5(%arg0: i32) -> (i32, i32) {
    %c0_i32 = arith.constant 0 : i32
    %c0_i32_0 = arith.constant 0 : i32
    %c0_i32_1 = arith.constant 0 : i32
    return %c0_i32, %c0_i32_0 : i32, i32
  }
  func.func @transform_6(%arg0: i32) -> (i32, i32) {
    %c0_i32 = arith.constant 0 : i32
    %c0_i32_0 = arith.constant 0 : i32
    %c0_i32_1 = arith.constant 0 : i32
    return %c0_i32, %c0_i32_0 : i32, i32
  }
  func.func @transform_7(%arg0: i32) -> (i32, i32) {
    %c0_i32 = arith.constant 0 : i32
    %c0_i32_0 = arith.constant 0 : i32
    return %arg0, %c0_i32 : i32, i32
  }
}

module attributes {stable_mosaic.version = 11 : i64} {
  func.func @_attn_sublayer_kernel(%arg0: i32, %arg1: i32, %arg2: memref<1x8x32xf32, #tpu.memory_space<vmem>>, %arg3: memref<1x8x32xf32, #tpu.memory_space<vmem>>, %arg4: memref<32x32xbf16, #tpu.memory_space<vmem>>, %arg5: memref<1x32xf32, #tpu.memory_space<vmem>>, %arg6: memref<32x64xbf16, #tpu.memory_space<vmem>>, %arg7: memref<1x64xf32, #tpu.memory_space<vmem>>, %arg8: memref<32x32xbf16, #tpu.memory_space<vmem>>, %arg9: memref<1x32xf32, #tpu.memory_space<vmem>>, %arg10: memref<1x32xf32, #tpu.memory_space<vmem>>, %arg11: memref<1x32xf32, #tpu.memory_space<vmem>>, %arg12: memref<1x8x32xf32, #tpu.memory_space<vmem>>, %arg13: memref<8x32xbf16, #tpu.memory_space<vmem>>) attributes {dimension_semantics = [#tpu.dimension_semantics<parallel>, #tpu.dimension_semantics<parallel>], iteration_bounds = array<i64: 2, 1>, scalar_prefetch = 0 : i64, scratch_operands = 1 : i64, tpu.core_type = #tpu.core_type<tc>, window_params = [{transform_indices = @transform_0, window_bounds = array<i64: 1, 8, 32>}, {transform_indices = @transform_1, window_bounds = array<i64: 1, 8, 32>}, {pipeline_mode = #tpu.pipeline_mode<synchronous>, transform_indices = @transform_2, window_bounds = array<i64: 32, 32>}, {pipeline_mode = #tpu.pipeline_mode<synchronous>, transform_indices = @transform_3, window_bounds = array<i64: 1, 32>}, {pipeline_mode = #tpu.pipeline_mode<synchronous>, transform_indices = @transform_4, window_bounds = array<i64: 32, 64>}, {pipeline_mode = #tpu.pipeline_mode<synchronous>, transform_indices = @transform_5, window_bounds = array<i64: 1, 64>}, {pipeline_mode = #tpu.pipeline_mode<synchronous>, transform_indices = @transform_6, window_bounds = array<i64: 32, 32>}, {pipeline_mode = #tpu.pipeline_mode<synchronous>, transform_indices = @transform_7, window_bounds = array<i64: 1, 32>}, {pipeline_mode = #tpu.pipeline_mode<synchronous>, transform_indices = @transform_8, window_bounds = array<i64: 1, 32>}, {pipeline_mode = #tpu.pipeline_mode<synchronous>, transform_indices = @transform_9, window_bounds = array<i64: 1, 32>}, {transform_indices = @transform_10, window_bounds = array<i64: 1, 8, 32>}]} {
    %c0 = arith.constant 0 : index
    %c0_0 = arith.constant 0 : index
    %c0_1 = arith.constant 0 : index
    %0 = vector.load %arg2[%c0, %c0_0, %c0_1] : memref<1x8x32xf32, #tpu.memory_space<vmem>>, vector<1x8x32xf32>
    %1 = vector.shape_cast %0 : vector<1x8x32xf32> to vector<8x32xf32>
    %c0_2 = arith.constant 0 : index
    %c0_3 = arith.constant 0 : index
    %c0_4 = arith.constant 0 : index
    %2 = vector.load %arg3[%c0_2, %c0_3, %c0_4] : memref<1x8x32xf32, #tpu.memory_space<vmem>>, vector<1x8x32xf32>
    %3 = vector.shape_cast %2 : vector<1x8x32xf32> to vector<8x32xf32>
    %4 = arith.truncf %1 : vector<8x32xf32> to vector<8x32xbf16>
    %c0_5 = arith.constant 0 : index
    %c0_6 = arith.constant 0 : index
    %5 = vector.load %arg4[%c0_5, %c0_6] : memref<32x32xbf16, #tpu.memory_space<vmem>>, vector<32x32xbf16>
    %cst = arith.constant dense<0.000000e+00> : vector<8x32xf32>
    %6 = tpu.matmul %4, %5, %cst {dimension_numbers = #tpu.dot_dimension_numbers<[1], [0], [0], [1], [0, 0, 1, 1], [], []>} : vector<8x32xbf16>, vector<32x32xbf16>, vector<8x32xf32> -> vector<8x32xf32>
    %c0_7 = arith.constant 0 : index
    %c0_8 = arith.constant 0 : index
    %7 = vector.load %arg5[%c0_7, %c0_8] : memref<1x32xf32, #tpu.memory_space<vmem>>, vector<1x32xf32>
    %8 = vector.broadcast %7 : vector<1x32xf32> to vector<8x32xf32>
    %9 = arith.addf %6, %8 : vector<8x32xf32>
    %cst_9 = arith.constant 0.353553385 : f32
    %10 = vector.broadcast %cst_9 : f32 to vector<8x32xf32>
    %11 = arith.mulf %9, %10 : vector<8x32xf32>
    %12 = arith.truncf %11 : vector<8x32xf32> to vector<8x32xbf16>
    %13 = arith.truncf %3 : vector<8x32xf32> to vector<8x32xbf16>
    %c0_10 = arith.constant 0 : index
    %c0_11 = arith.constant 0 : index
    %14 = vector.load %arg6[%c0_10, %c0_11] : memref<32x64xbf16, #tpu.memory_space<vmem>>, vector<32x64xbf16>
    %cst_12 = arith.constant dense<0.000000e+00> : vector<8x64xf32>
    %15 = tpu.matmul %13, %14, %cst_12 {dimension_numbers = #tpu.dot_dimension_numbers<[1], [0], [0], [1], [0, 0, 1, 1], [], []>} : vector<8x32xbf16>, vector<32x64xbf16>, vector<8x64xf32> -> vector<8x64xf32>
    %c0_13 = arith.constant 0 : index
    %c0_14 = arith.constant 0 : index
    %16 = vector.load %arg7[%c0_13, %c0_14] : memref<1x64xf32, #tpu.memory_space<vmem>>, vector<1x64xf32>
    %17 = vector.broadcast %16 : vector<1x64xf32> to vector<8x64xf32>
    %18 = arith.addf %15, %17 : vector<8x64xf32>
    %19 = vector.extract_strided_slice %18 {offsets = [0, 0], sizes = [8, 32], strides = [1, 1]} : vector<8x64xf32> to vector<8x32xf32>
    %20 = arith.truncf %19 : vector<8x32xf32> to vector<8x32xbf16>
    %21 = vector.extract_strided_slice %18 {offsets = [0, 32], sizes = [8, 32], strides = [1, 1]} : vector<8x64xf32> to vector<8x32xf32>
    %22 = arith.truncf %21 : vector<8x32xf32> to vector<8x32xbf16>
    %23 = vector.extract_strided_slice %12 {offsets = [0, 0], sizes = [8, 8], strides = [1, 1]} : vector<8x32xbf16> to vector<8x8xbf16>
    %24 = vector.extract_strided_slice %20 {offsets = [0, 0], sizes = [8, 8], strides = [1, 1]} : vector<8x32xbf16> to vector<8x8xbf16>
    %cst_15 = arith.constant dense<0.000000e+00> : vector<8x8xf32>
    %25 = tpu.matmul %23, %24, %cst_15 {dimension_numbers = #tpu.dot_dimension_numbers<[1], [1], [0], [0], [0, 0, 1, 0], [], []>} : vector<8x8xbf16>, vector<8x8xbf16>, vector<8x8xf32> -> vector<8x8xf32>
    %cst_16 = arith.constant dense<0xFF800000> : vector<8xf32>
    %26 = vector.multi_reduction <maximumf>, %25, %cst_16 [1] : vector<8x8xf32> to vector<8xf32>
    %27 = vector.shape_cast %26 : vector<8xf32> to vector<8x1xf32>
    %28 = vector.broadcast %27 : vector<8x1xf32> to vector<8x8xf32>
    %29 = arith.subf %25, %28 : vector<8x8xf32>
    %30 = math.exp %29 : vector<8x8xf32>
    %cst_17 = arith.constant dense<0.000000e+00> : vector<8xf32>
    %31 = vector.multi_reduction <add>, %30, %cst_17 [1] : vector<8x8xf32> to vector<8xf32>
    %32 = vector.shape_cast %31 : vector<8xf32> to vector<8x1xf32>
    %33 = arith.truncf %30 : vector<8x8xf32> to vector<8x8xbf16>
    %34 = vector.extract_strided_slice %22 {offsets = [0, 0], sizes = [8, 8], strides = [1, 1]} : vector<8x32xbf16> to vector<8x8xbf16>
    %cst_18 = arith.constant dense<0.000000e+00> : vector<8x8xf32>
    %35 = tpu.matmul %33, %34, %cst_18 {dimension_numbers = #tpu.dot_dimension_numbers<[1], [0], [0], [1], [0, 0, 1, 1], [], []>} : vector<8x8xbf16>, vector<8x8xbf16>, vector<8x8xf32> -> vector<8x8xf32>
    %36 = vector.broadcast %32 : vector<8x1xf32> to vector<8x8xf32>
    %37 = arith.divf %35, %36 : vector<8x8xf32>
    %38 = vector.extract_strided_slice %12 {offsets = [0, 8], sizes = [8, 8], strides = [1, 1]} : vector<8x32xbf16> to vector<8x8xbf16>
    %39 = vector.extract_strided_slice %20 {offsets = [0, 8], sizes = [8, 8], strides = [1, 1]} : vector<8x32xbf16> to vector<8x8xbf16>
    %cst_19 = arith.constant dense<0.000000e+00> : vector<8x8xf32>
    %40 = tpu.matmul %38, %39, %cst_19 {dimension_numbers = #tpu.dot_dimension_numbers<[1], [1], [0], [0], [0, 0, 1, 0], [], []>} : vector<8x8xbf16>, vector<8x8xbf16>, vector<8x8xf32> -> vector<8x8xf32>
    %cst_20 = arith.constant dense<0xFF800000> : vector<8xf32>
    %41 = vector.multi_reduction <maximumf>, %40, %cst_20 [1] : vector<8x8xf32> to vector<8xf32>
    %42 = vector.shape_cast %41 : vector<8xf32> to vector<8x1xf32>
    %43 = vector.broadcast %42 : vector<8x1xf32> to vector<8x8xf32>
    %44 = arith.subf %40, %43 : vector<8x8xf32>
    %45 = math.exp %44 : vector<8x8xf32>
    %cst_21 = arith.constant dense<0.000000e+00> : vector<8xf32>
    %46 = vector.multi_reduction <add>, %45, %cst_21 [1] : vector<8x8xf32> to vector<8xf32>
    %47 = vector.shape_cast %46 : vector<8xf32> to vector<8x1xf32>
    %48 = arith.truncf %45 : vector<8x8xf32> to vector<8x8xbf16>
    %49 = vector.extract_strided_slice %22 {offsets = [0, 8], sizes = [8, 8], strides = [1, 1]} : vector<8x32xbf16> to vector<8x8xbf16>
    %cst_22 = arith.constant dense<0.000000e+00> : vector<8x8xf32>
    %50 = tpu.matmul %48, %49, %cst_22 {dimension_numbers = #tpu.dot_dimension_numbers<[1], [0], [0], [1], [0, 0, 1, 1], [], []>} : vector<8x8xbf16>, vector<8x8xbf16>, vector<8x8xf32> -> vector<8x8xf32>
    %51 = vector.broadcast %47 : vector<8x1xf32> to vector<8x8xf32>
    %52 = arith.divf %50, %51 : vector<8x8xf32>
    %53 = vector.extract_strided_slice %12 {offsets = [0, 16], sizes = [8, 8], strides = [1, 1]} : vector<8x32xbf16> to vector<8x8xbf16>
    %54 = vector.extract_strided_slice %20 {offsets = [0, 16], sizes = [8, 8], strides = [1, 1]} : vector<8x32xbf16> to vector<8x8xbf16>
    %cst_23 = arith.constant dense<0.000000e+00> : vector<8x8xf32>
    %55 = tpu.matmul %53, %54, %cst_23 {dimension_numbers = #tpu.dot_dimension_numbers<[1], [1], [0], [0], [0, 0, 1, 0], [], []>} : vector<8x8xbf16>, vector<8x8xbf16>, vector<8x8xf32> -> vector<8x8xf32>
    %cst_24 = arith.constant dense<0xFF800000> : vector<8xf32>
    %56 = vector.multi_reduction <maximumf>, %55, %cst_24 [1] : vector<8x8xf32> to vector<8xf32>
    %57 = vector.shape_cast %56 : vector<8xf32> to vector<8x1xf32>
    %58 = vector.broadcast %57 : vector<8x1xf32> to vector<8x8xf32>
    %59 = arith.subf %55, %58 : vector<8x8xf32>
    %60 = math.exp %59 : vector<8x8xf32>
    %cst_25 = arith.constant dense<0.000000e+00> : vector<8xf32>
    %61 = vector.multi_reduction <add>, %60, %cst_25 [1] : vector<8x8xf32> to vector<8xf32>
    %62 = vector.shape_cast %61 : vector<8xf32> to vector<8x1xf32>
    %63 = arith.truncf %60 : vector<8x8xf32> to vector<8x8xbf16>
    %64 = vector.extract_strided_slice %22 {offsets = [0, 16], sizes = [8, 8], strides = [1, 1]} : vector<8x32xbf16> to vector<8x8xbf16>
    %cst_26 = arith.constant dense<0.000000e+00> : vector<8x8xf32>
    %65 = tpu.matmul %63, %64, %cst_26 {dimension_numbers = #tpu.dot_dimension_numbers<[1], [0], [0], [1], [0, 0, 1, 1], [], []>} : vector<8x8xbf16>, vector<8x8xbf16>, vector<8x8xf32> -> vector<8x8xf32>
    %66 = vector.broadcast %62 : vector<8x1xf32> to vector<8x8xf32>
    %67 = arith.divf %65, %66 : vector<8x8xf32>
    %68 = vector.extract_strided_slice %12 {offsets = [0, 24], sizes = [8, 8], strides = [1, 1]} : vector<8x32xbf16> to vector<8x8xbf16>
    %69 = vector.extract_strided_slice %20 {offsets = [0, 24], sizes = [8, 8], strides = [1, 1]} : vector<8x32xbf16> to vector<8x8xbf16>
    %cst_27 = arith.constant dense<0.000000e+00> : vector<8x8xf32>
    %70 = tpu.matmul %68, %69, %cst_27 {dimension_numbers = #tpu.dot_dimension_numbers<[1], [1], [0], [0], [0, 0, 1, 0], [], []>} : vector<8x8xbf16>, vector<8x8xbf16>, vector<8x8xf32> -> vector<8x8xf32>
    %cst_28 = arith.constant dense<0xFF800000> : vector<8xf32>
    %71 = vector.multi_reduction <maximumf>, %70, %cst_28 [1] : vector<8x8xf32> to vector<8xf32>
    %72 = vector.shape_cast %71 : vector<8xf32> to vector<8x1xf32>
    %73 = vector.broadcast %72 : vector<8x1xf32> to vector<8x8xf32>
    %74 = arith.subf %70, %73 : vector<8x8xf32>
    %75 = math.exp %74 : vector<8x8xf32>
    %cst_29 = arith.constant dense<0.000000e+00> : vector<8xf32>
    %76 = vector.multi_reduction <add>, %75, %cst_29 [1] : vector<8x8xf32> to vector<8xf32>
    %77 = vector.shape_cast %76 : vector<8xf32> to vector<8x1xf32>
    %78 = arith.truncf %75 : vector<8x8xf32> to vector<8x8xbf16>
    %79 = vector.extract_strided_slice %22 {offsets = [0, 24], sizes = [8, 8], strides = [1, 1]} : vector<8x32xbf16> to vector<8x8xbf16>
    %cst_30 = arith.constant dense<0.000000e+00> : vector<8x8xf32>
    %80 = tpu.matmul %78, %79, %cst_30 {dimension_numbers = #tpu.dot_dimension_numbers<[1], [0], [0], [1], [0, 0, 1, 1], [], []>} : vector<8x8xbf16>, vector<8x8xbf16>, vector<8x8xf32> -> vector<8x8xf32>
    %81 = vector.broadcast %77 : vector<8x1xf32> to vector<8x8xf32>
    %82 = arith.divf %80, %81 : vector<8x8xf32>
    %83 = tpu.concatenate %37, %52, %67, %82 in 1 : vector<8x8xf32>, vector<8x8xf32>, vector<8x8xf32>, vector<8x8xf32> -> vector<8x32xf32>
    %84 = arith.truncf %83 : vector<8x32xf32> to vector<8x32xbf16>
    %c0_31 = arith.constant 0 : index
    %c0_32 = arith.constant 0 : index
    %85 = vector.load %arg13[%c0_31, %c0_32] : memref<8x32xbf16, #tpu.memory_space<vmem>>, vector<8x32xbf16>
    tpu.vector_store %arg13[%c0_31, %c0_32], %84 {strides = array<i32>} : memref<8x32xbf16, #tpu.memory_space<vmem>>, vector<8x32xbf16>,
    %c0_33 = arith.constant 0 : index
    %c0_34 = arith.constant 0 : index
    %86 = vector.load %arg13[%c0_33, %c0_34] : memref<8x32xbf16, #tpu.memory_space<vmem>>, vector<8x32xbf16>
    %c0_35 = arith.constant 0 : index
    %c0_36 = arith.constant 0 : index
    %87 = vector.load %arg8[%c0_35, %c0_36] : memref<32x32xbf16, #tpu.memory_space<vmem>>, vector<32x32xbf16>
    %cst_37 = arith.constant dense<0.000000e+00> : vector<8x32xf32>
    %88 = tpu.matmul %86, %87, %cst_37 {dimension_numbers = #tpu.dot_dimension_numbers<[1], [0], [0], [1], [0, 0, 1, 1], [], []>} : vector<8x32xbf16>, vector<32x32xbf16>, vector<8x32xf32> -> vector<8x32xf32>
    %c0_38 = arith.constant 0 : index
    %c0_39 = arith.constant 0 : index
    %89 = vector.load %arg9[%c0_38, %c0_39] : memref<1x32xf32, #tpu.memory_space<vmem>>, vector<1x32xf32>
    %90 = vector.broadcast %89 : vector<1x32xf32> to vector<8x32xf32>
    %91 = arith.addf %88, %90 : vector<8x32xf32>
    %92 = arith.addf %91, %1 : vector<8x32xf32>
    %cst_40 = arith.constant dense<0.000000e+00> : vector<8xf32>
    %93 = vector.multi_reduction <add>, %92, %cst_40 [1] : vector<8x32xf32> to vector<8xf32>
    %94 = vector.shape_cast %93 : vector<8xf32> to vector<8x1xf32>
    %cst_41 = arith.constant 3.200000e+01 : f32
    %95 = vector.broadcast %cst_41 : f32 to vector<8x1xf32>
    %96 = arith.divf %94, %95 : vector<8x1xf32>
    %97 = vector.broadcast %96 : vector<8x1xf32> to vector<8x32xf32>
    %98 = arith.subf %92, %97 : vector<8x32xf32>
    %99 = arith.mulf %98, %98 : vector<8x32xf32>
    %cst_42 = arith.constant dense<0.000000e+00> : vector<8xf32>
    %100 = vector.multi_reduction <add>, %99, %cst_42 [1] : vector<8x32xf32> to vector<8xf32>
    %101 = vector.shape_cast %100 : vector<8xf32> to vector<8x1xf32>
    %cst_43 = arith.constant 3.200000e+01 : f32
    %102 = vector.broadcast %cst_43 : f32 to vector<8x1xf32>
    %103 = arith.divf %101, %102 : vector<8x1xf32>
    %104 = vector.broadcast %96 : vector<8x1xf32> to vector<8x32xf32>
    %105 = arith.subf %92, %104 : vector<8x32xf32>
    %cst_44 = arith.constant 9.99999974E-6 : f32
    %106 = vector.broadcast %cst_44 : f32 to vector<8x1xf32>
    %107 = arith.addf %103, %106 : vector<8x1xf32>
    %108 = math.rsqrt %107 : vector<8x1xf32>
    %109 = vector.broadcast %108 : vector<8x1xf32> to vector<8x32xf32>
    %110 = arith.mulf %105, %109 : vector<8x32xf32>
    %c0_45 = arith.constant 0 : index
    %c0_46 = arith.constant 0 : index
    %111 = vector.load %arg10[%c0_45, %c0_46] : memref<1x32xf32, #tpu.memory_space<vmem>>, vector<1x32xf32>
    %112 = vector.broadcast %111 : vector<1x32xf32> to vector<8x32xf32>
    %113 = arith.mulf %110, %112 : vector<8x32xf32>
    %c0_47 = arith.constant 0 : index
    %c0_48 = arith.constant 0 : index
    %114 = vector.load %arg11[%c0_47, %c0_48] : memref<1x32xf32, #tpu.memory_space<vmem>>, vector<1x32xf32>
    %115 = vector.broadcast %114 : vector<1x32xf32> to vector<8x32xf32>
    %116 = arith.addf %113, %115 : vector<8x32xf32>
    %c0_49 = arith.constant 0 : index
    %c0_50 = arith.constant 0 : index
    %c0_51 = arith.constant 0 : index
    %117 = vector.load %arg12[%c0_49, %c0_50, %c0_51] : memref<1x8x32xf32, #tpu.memory_space<vmem>>, vector<1x8x32xf32>
    %118 = vector.shape_cast %117 : vector<1x8x32xf32> to vector<8x32xf32>
    %119 = vector.shape_cast %116 : vector<8x32xf32> to vector<1x8x32xf32>
    tpu.vector_store %arg12[%c0_49, %c0_50, %c0_51], %119 {strides = array<i32>} : memref<1x8x32xf32, #tpu.memory_space<vmem>>, vector<1x8x32xf32>,
    return
  }
  func.func @transform_0(%arg0: i32, %arg1: i32) -> (i32, i32, i32) {
    %c0_i32 = arith.constant 0 : i32
    %c0_i32_0 = arith.constant 0 : i32
    return %arg0, %arg1, %c0_i32 : i32, i32, i32
  }
  func.func @transform_1(%arg0: i32, %arg1: i32) -> (i32, i32, i32) {
    %c0_i32 = arith.constant 0 : i32
    %c0_i32_0 = arith.constant 0 : i32
    %c0_i32_1 = arith.constant 0 : i32
    return %arg0, %c0_i32, %c0_i32_0 : i32, i32, i32
  }
  func.func @transform_2(%arg0: i32, %arg1: i32) -> (i32, i32) {
    %c0_i32 = arith.constant 0 : i32
    %c0_i32_0 = arith.constant 0 : i32
    %c0_i32_1 = arith.constant 0 : i32
    return %c0_i32, %c0_i32_0 : i32, i32
  }
  func.func @transform_3(%arg0: i32, %arg1: i32) -> (i32, i32) {
    %c0_i32 = arith.constant 0 : i32
    %c0_i32_0 = arith.constant 0 : i32
    %c0_i32_1 = arith.constant 0 : i32
    return %c0_i32, %c0_i32_0 : i32, i32
  }
  func.func @transform_4(%arg0: i32, %arg1: i32) -> (i32, i32) {
    %c0_i32 = arith.constant 0 : i32
    %c0_i32_0 = arith.constant 0 : i32
    %c0_i32_1 = arith.constant 0 : i32
    return %c0_i32, %c0_i32_0 : i32, i32
  }
  func.func @transform_5(%arg0: i32, %arg1: i32) -> (i32, i32) {
    %c0_i32 = arith.constant 0 : i32
    %c0_i32_0 = arith.constant 0 : i32
    %c0_i32_1 = arith.constant 0 : i32
    return %c0_i32, %c0_i32_0 : i32, i32
  }
  func.func @transform_6(%arg0: i32, %arg1: i32) -> (i32, i32) {
    %c0_i32 = arith.constant 0 : i32
    %c0_i32_0 = arith.constant 0 : i32
    %c0_i32_1 = arith.constant 0 : i32
    return %c0_i32, %c0_i32_0 : i32, i32
  }
  func.func @transform_7(%arg0: i32, %arg1: i32) -> (i32, i32) {
    %c0_i32 = arith.constant 0 : i32
    %c0_i32_0 = arith.constant 0 : i32
    %c0_i32_1 = arith.constant 0 : i32
    return %c0_i32, %c0_i32_0 : i32, i32
  }
  func.func @transform_8(%arg0: i32, %arg1: i32) -> (i32, i32) {
    %c0_i32 = arith.constant 0 : i32
    %c0_i32_0 = arith.constant 0 : i32
    %c0_i32_1 = arith.constant 0 : i32
    return %c0_i32, %c0_i32_0 : i32, i32
  }
  func.func @transform_9(%arg0: i32, %arg1: i32) -> (i32, i32) {
    %c0_i32 = arith.constant 0 : i32
    %c0_i32_0 = arith.constant 0 : i32
    %c0_i32_1 = arith.constant 0 : i32
    return %c0_i32, %c0_i32_0 : i32, i32
  }
  func.func @transform_10(%arg0: i32, %arg1: i32) -> (i32, i32, i32) {
    %c0_i32 = arith.constant 0 : i32
    %c0_i32_0 = arith.constant 0 : i32
    return %arg0, %arg1, %c0_i32 : i32, i32, i32
  }
}

</mosaic_0001>

<llo_original>
// kernel: boring_encoder_block.3
$region0: #{boring_encoder_block.3}
  #allocation0 [shape = 'u32[]', space=smem, size = 0x4, offset = 0x4, fixed_abs, tag = 'smem constant byte address 0x4 - core index']
  #allocation1 [shape = 'u32[144,128]{1,0:T(1,128)}', space=vmem, size = 0x12000, scoped, tag = 'internal scratch']
  %s0 = inlined_call_operand.vmem [shape: f32[16,32], index: 0, kind: input, shape index: {}]
  %s1 = inlined_call_operand.vmem [shape: bf16[32,64], index: 1, kind: input, shape index: {}]
  %s2 = inlined_call_operand.vmem [shape: f32[1,64], index: 2, kind: input, shape index: {}]
  %s3 = inlined_call_operand.vmem [shape: bf16[64,32], index: 3, kind: input, shape index: {}]
  %s4 = inlined_call_operand.vmem [shape: f32[1,32], index: 4, kind: input, shape index: {}]
  %s5 = inlined_call_operand.vmem [shape: f32[1,32], index: 5, kind: input, shape index: {}]
  %s6 = inlined_call_operand.vmem [shape: f32[1,32], index: 6, kind: input, shape index: {}]
  %s7 = inlined_call_operand.hbm [shape: f32[16,32], index: 7, kind: output, shape index: {}]
  %s8 = sld [smem:[#allocation0]]
  $region38: #{boring_encoder_block.3} parent=0
    _
  %s10 = ssub.s32 1, %s8
  %s11 = scalar_select 0, %s10, %s8
  $region1: #{boring_encoder_block.3} parent=0
    #allocation2 [shape = 'u8[8192]{0}', space=vmem, size = 0x2000, scoped, tag = 'output window, operand 0, single buffered']
    #allocation3 [shape = 's32[1]{0}', space=sflag, size = 0x4, scoped, tag = 'scoped memory for boring_encoder_block.3']
    %12 = vsyncpa [#allocation3], 0
    // Predicated region
    $region2: #{boring_encoder_block.3} parent=1 // pred_check
      _
    $region3: #{boring_encoder_block.3} parent=1 // pred_check_branch
      %14 = sbr.rel (0) target = $region5
    $region4: #{boring_encoder_block.3} parent=1 // pred_region
      _
    $region5: #{boring_encoder_block.3} parent=1 // pred_fallthru
      _
    // Predicated region
    $region6: #{boring_encoder_block.3} parent=1 // pred_check
      _
    $region7: #{boring_encoder_block.3} parent=1 // pred_check_branch
      %16 = sbr.rel (0) target = $region9
    $region8: #{boring_encoder_block.3} parent=1 // pred_region
      _
    $region9: #{boring_encoder_block.3} parent=1 // pred_fallthru
      _
    // Predicated region
    $region10: #{boring_encoder_block.3} parent=1 // pred_check
      _
    $region11: #{boring_encoder_block.3} parent=1 // pred_check_branch
      %18 = sbr.rel (0) target = $region13
    $region12: #{boring_encoder_block.3} parent=1 // pred_region
      _
    $region13: #{boring_encoder_block.3} parent=1 // pred_fallthru
      _
    // Predicated region
    $region14: #{boring_encoder_block.3} parent=1 // pred_check
      _
    $region15: #{boring_encoder_block.3} parent=1 // pred_check_branch
      %20 = sbr.rel (0) target = $region17
    $region16: #{boring_encoder_block.3} parent=1 // pred_region
      _
    $region17: #{boring_encoder_block.3} parent=1 // pred_fallthru
      _
    // Predicated region
    $region18: #{boring_encoder_block.3} parent=1 // pred_check
      _
    $region19: #{boring_encoder_block.3} parent=1 // pred_check_branch
      %22 = sbr.rel (0) target = $region21
    $region20: #{boring_encoder_block.3} parent=1 // pred_region
      _
    $region21: #{boring_encoder_block.3} parent=1 // pred_fallthru
      _
    // Predicated region
    $region22: #{boring_encoder_block.3} parent=1 // pred_check
      _
    $region23: #{boring_encoder_block.3} parent=1 // pred_check_branch
      %24 = sbr.rel (0) target = $region25
    $region24: #{boring_encoder_block.3} parent=1 // pred_region
      _
    $region25: #{boring_encoder_block.3} parent=1 // pred_fallthru
      _
    // Predicated region
    $region26: #{boring_encoder_block.3} parent=1 // pred_check
      _
    $region27: #{boring_encoder_block.3} parent=1 // pred_check_branch
      %26 = sbr.rel (0) target = $region29
    $region28: #{boring_encoder_block.3} parent=1 // pred_region
      _
    $region29: #{boring_encoder_block.3} parent=1 // pred_fallthru
      _
    %v28 = vld [vmem:[%s0] sm:$0xff]
    %v29 = vld [vmem:[%s0 + $0x8] sm:$0xff]
    %v30 = vpack.c.bf16 %v29, %v28
    %v31 = vld [vmem:[%s1] sm:$0xf]
    %v32 = vld [vmem:[%s1 + $0x4] sm:$0xf]
    %v33 = vld [vmem:[%s1 + $0x8] sm:$0xf]
    %v34 = vld [vmem:[%s1 + $0xc] sm:$0xf]
    %v35 = vld [vmem:[%s2] sm:$0x1]
    %v37 = vlaneseq
    %v38 = vshrl.u32 %v37, 7
    %v39 = vsub.s32 0, %v38
    %v40 = vrot.slane %v35, %v39
    %v46 = vunpack.c.l.b16 %v31
    %v47 = vunpack.c.l.b16 %v32
    %v48 = vunpack.c.l.b16 %v33
    %v49 = vunpack.c.l.b16 %v34
    %v50 = vpack.c.b16 %v47, %v46
    %v51 = vpack.c.b16 %v49, %v48
    %vm54 = vcmask 261120
    %v56 = vsel %vm54, %v30, 0
    %58 = vmatprep.subr.bf16.mxu0 0
    %59 = vmatpush1.bf16.msra.mxu0 0
    %60 = vmatprep.subr.bf16.mxu0 0
    %61 = vmatpush1.bf16.msra.mxu0 0
    %62 = vmatprep.subr.bf16.mxu0 0
    %63 = vmatpush1.bf16.msra.mxu0 0
    %64 = vmatprep.subr.bf16.mxu0 0
    %65 = vmatpush1.bf16.msra.mxu0 0
    %66 = vmatprep.subr.bf16.mxu0 0
    %67 = vmatpush1.bf16.msra.mxu0 0
    %68 = vmatprep.subr.bf16.mxu0 0
    %69 = vmatpush1.bf16.msra.mxu0 0
    %70 = vmatprep.subr.bf16.mxu0 0
    %71 = vmatpush1.bf16.msra.mxu0 %v51
    %72 = vmatprep.subr.bf16.mxu0 0
    %73 = vmatpush1.bf16.msra.mxu0 %v50
    %74 = vmatprep.subr.bf16.mxu0 0
    %75 = vmatpush2.bf16.msra.mxu0 0
    %76 = vmatprep.subr.bf16.mxu0 0
    %77 = vmatpush2.bf16.msra.mxu0 0
    %78 = vmatprep.subr.bf16.mxu0 0
    %79 = vmatpush2.bf16.msra.mxu0 0
    %80 = vmatprep.subr.bf16.mxu0 0
    %81 = vmatpush2.bf16.msra.mxu0 0
    %82 = vmatprep.subr.bf16.mxu0 0
    %83 = vmatpush2.bf16.msra.mxu0 0
    %84 = vmatprep.subr.bf16.mxu0 0
    %85 = vmatpush2.bf16.msra.mxu0 0
    %86 = vmatprep.subr.bf16.mxu0 0
    %87 = vmatpush2.bf16.msra.mxu0 0
    %88 = vmatprep.subr.bf16.mxu0 0
    %89 = vmatpush2.bf16.msra.mxu0 0
    %90 = vmatprep.mubr.bf16.mxu0 0
    %91 = vmatmul.mubr.bf16.gmra.mxu0 %v56
    %v92 = vpop.f32.mrf.mxu0
    %v93 = vadd.f32 %v40, %v92
    %v94 = vpop.f32.mrf.mxu0
    %v95 = vpop.f32.mrf.mxu0
    %v96 = vadd.f32 %v40, %v95
    %v97 = vpop.f32.mrf.mxu0
    %98 = vdwg.mxu0
    %v99 = vmax.f32 %v93, 0.0
    %v100 = vmax.f32 %v96, 0.0
    %v101 = vpack.c.bf16 %v100, %v99
    %v102 = vld [vmem:[%s3] sm:$0xf]
    %v103 = vld [vmem:[%s3 + $0x4] sm:$0xf]
    %v104 = vld [vmem:[%s3 + $0x8] sm:$0xf]
    %v105 = vld [vmem:[%s3 + $0xc] sm:$0xf]
    %v106 = vld [vmem:[%s3 + $0x10] sm:$0xf]
    %v107 = vld [vmem:[%s3 + $0x14] sm:$0xf]
    %v108 = vld [vmem:[%s3 + $0x18] sm:$0xf]
    %v109 = vld [vmem:[%s3 + $0x1c] sm:$0xf]
    %v110 = vld [vmem:[%s4] sm:$0x1]
    %v112 = vlaneseq
    %v113 = vshrl.u32 %v112, 7
    %v114 = vsub.s32 0, %v113
    %v115 = vrot.slane %v110, %v114
    %v125 = vunpack.c.l.b16 %v102
    %v126 = vunpack.c.l.b16 %v103
    %v127 = vunpack.c.l.b16 %v104
    %v128 = vunpack.c.l.b16 %v105
    %v129 = vunpack.c.l.b16 %v106
    %v130 = vunpack.c.l.b16 %v107
    %v131 = vunpack.c.l.b16 %v108
    %v132 = vunpack.c.l.b16 %v109
    %v133 = vpack.c.b16 %v126, %v125
    %v134 = vpack.c.b16 %v128, %v127
    %v135 = vpack.c.b16 %v130, %v129
    %v136 = vpack.c.b16 %v132, %v131
    %vm141 = vcmask 523264
    %v143 = vsel %vm141, %v101, 0
    %145 = vmatprep.subr.bf16.mxu0 0
    %146 = vmatpush1.bf16.msra.mxu0 0
    %147 = vmatprep.subr.bf16.mxu0 0
    %148 = vmatpush1.bf16.msra.mxu0 0
    %149 = vmatprep.subr.bf16.mxu0 0
    %150 = vmatpush1.bf16.msra.mxu0 0
    %151 = vmatprep.subr.bf16.mxu0 0
    %152 = vmatpush1.bf16.msra.mxu0 0
    %153 = vmatprep.subr.bf16.mxu0 0
    %154 = vmatpush1.bf16.msra.mxu0 %v136
    %155 = vmatprep.subr.bf16.mxu0 0
    %156 = vmatpush1.bf16.msra.mxu0 %v135
    %157 = vmatprep.subr.bf16.mxu0 0
    %158 = vmatpush1.bf16.msra.mxu0 %v134
    %159 = vmatprep.subr.bf16.mxu0 0
    %160 = vmatpush1.bf16.msra.mxu0 %v133
    %161 = vmatprep.subr.bf16.mxu0 0
    %162 = vmatpush2.bf16.msra.mxu0 0
    %163 = vmatprep.subr.bf16.mxu0 0
    %164 = vmatpush2.bf16.msra.mxu0 0
    %165 = vmatprep.subr.bf16.mxu0 0
    %166 = vmatpush2.bf16.msra.mxu0 0
    %167 = vmatprep.subr.bf16.mxu0 0
    %168 = vmatpush2.bf16.msra.mxu0 0
    %169 = vmatprep.subr.bf16.mxu0 0
    %170 = vmatpush2.bf16.msra.mxu0 0
    %171 = vmatprep.subr.bf16.mxu0 0
    %172 = vmatpush2.bf16.msra.mxu0 0
    %173 = vmatprep.subr.bf16.mxu0 0
    %174 = vmatpush2.bf16.msra.mxu0 0
    %175 = vmatprep.subr.bf16.mxu0 0
    %176 = vmatpush2.bf16.msra.mxu0 0
    %177 = vmatprep.mubr.bf16.mxu0 0
    %178 = vmatmul.mubr.bf16.gmra.mxu0 %v143
    %v179 = vpop.f32.mrf.mxu0
    %v180 = vadd.f32 %v115, %v179
    %v181 = vpop.f32.mrf.mxu0
    %v182 = vpop.f32.mrf.mxu0
    %v183 = vadd.f32 %v115, %v182
    %v184 = vpop.f32.mrf.mxu0
    %185 = vdwg.mxu0
    %v186 = vadd.f32 %v180, %v28
    %v187 = vadd.f32 %v183, %v29
    %v188 = vsel %vm54, %v186, 0.0
    %189 = vadd.xlane.f32.xlu0 %v188
    %v190 = vpop.xlane.xlu0 %189
    %v191 = vsel %vm54, %v187, 0.0
    %192 = vadd.xlane.f32.xlu0 %v191
    %v193 = vpop.xlane.xlu0 %192
    %v194 = vrcp.pop 32.0
    %v195 = vmul.f32 %v190, %v194
    %v196 = vmul.f32 %v193, %v194
    %v197 = vsub.f32 %v186, %v195
    %v198 = vsub.f32 %v187, %v196
    %v199 = vmul.f32 %v197, %v197
    %v200 = vmul.f32 %v198, %v198
    %v201 = vsel %vm54, %v199, 0.0
    %202 = vadd.xlane.f32.xlu0 %v201
    %v203 = vpop.xlane.xlu0 %202
    %v204 = vsel %vm54, %v200, 0.0
    %205 = vadd.xlane.f32.xlu0 %v204
    %v206 = vpop.xlane.xlu0 %205
    %v207 = vmul.f32 %v203, %v194
    %v208 = vmul.f32 %v206, %v194
    %v209 = vadd.f32 %v207, 1e-05
    %v210 = vadd.f32 %v208, 1e-05
    %v211 = vrsqrt.pop %v209
    %v212 = vrsqrt.pop %v210
    %v213 = vmul.f32 %v197, %v211
    %v214 = vmul.f32 %v198, %v212
    %v215 = vld [vmem:[%s5] sm:$0x1]
    %v217 = vlaneseq
    %v218 = vshrl.u32 %v217, 7
    %v219 = vsub.s32 0, %v218
    %v220 = vrot.slane %v215, %v219
    %v222 = vmul.f32 %v213, %v220
    %v223 = vmul.f32 %v214, %v220
    %v224 = vld [vmem:[%s6] sm:$0x1]
    %v226 = vlaneseq
    %v227 = vshrl.u32 %v226, 7
    %v228 = vsub.s32 0, %v227
    %v229 = vrot.slane %v224, %v228
    %v231 = vadd.f32 %v222, %v229
    %v232 = vadd.f32 %v223, %v229
    %233 = vst.msk [vmem:[#allocation2] sm:$0xff] %vm54, %v231
    %234 = vst.msk [vmem:[#allocation2 + $0x8] sm:$0xff] %vm54, %v232
    // Predicated region
    $region30: #{boring_encoder_block.3} parent=1 // pred_check
      _
    $region31: #{boring_encoder_block.3} parent=1 // pred_check_branch
      %236 = sbr.rel (0) target = $region33
    $region32: #{boring_encoder_block.3} parent=1 // pred_region
      %s238 = ssub.s32 256, 256
      %239 = vsyncadd [#allocation3], %s238
      %s240 = sshll.u32 [#allocation2], 4
      %s241 = int_to_ptr.vmem [resolvable:$true] %s240
      %246 = dma.vmem_to_hbm [thread:$0]  %s241, 256, %s7, [#allocation3], 128, 128, 8
    $region33: #{boring_encoder_block.3} parent=1 // pred_fallthru
      _
    // Predicated region
    $region34: #{boring_encoder_block.3} parent=1 // pred_check
      _
    $region35: #{boring_encoder_block.3} parent=1 // pred_check_branch
      %248 = sbr.rel (0) target = $region37
    $region36: #{boring_encoder_block.3} parent=1 // pred_region
      %249 = dma.done [#allocation3], 256
    $region37: #{boring_encoder_block.3} parent=1 // pred_fallthru
      _
    %250 = vsyncpa [#allocation3], 1

// kernel: boring_encoder_block.2
$region0: #{boring_encoder_block.2}
  #allocation0 [shape = 'u32[]', space=smem, size = 0x4, offset = 0x4, fixed_abs, tag = 'smem constant byte address 0x4 - core index']
  #allocation1 [shape = 'u32[144,128]{1,0:T(1,128)}', space=vmem, size = 0x12000, scoped, tag = 'internal scratch']
  #allocation2 [shape = 'bf16[8,32]{1,0:T(8,128)(2,1)}', space=vmem, size = 0x800, scoped, tag = 'scratch operand']
  %s0 = inlined_call_operand.hbm [shape: f32[2,8,32], index: 0, kind: input, shape index: {}, may-alias: {0,1}]
  %s1 = inlined_call_operand.hbm [shape: f32[2,8,32], index: 1, kind: input, shape index: {}, may-alias: {0,1}]
  %s2 = inlined_call_operand.vmem [shape: bf16[32,32], index: 2, kind: input, shape index: {}]
  %s3 = inlined_call_operand.vmem [shape: f32[1,32], index: 3, kind: input, shape index: {}]
  %s4 = inlined_call_operand.hbm [shape: bf16[32,64], index: 4, kind: input, shape index: {}]
  %s5 = inlined_call_operand.vmem [shape: f32[1,64], index: 5, kind: input, shape index: {}]
  %s6 = inlined_call_operand.hbm [shape: bf16[32,32], index: 6, kind: input, shape index: {}]
  %s7 = inlined_call_operand.vmem [shape: f32[1,32], index: 7, kind: input, shape index: {}]
  %s8 = inlined_call_operand.vmem [shape: f32[1,32], index: 8, kind: input, shape index: {}]
  %s9 = inlined_call_operand.vmem [shape: f32[1,32], index: 9, kind: input, shape index: {}]
  %s10 = inlined_call_operand.vmem [shape: f32[2,8,32], index: 10, kind: output, shape index: {}]
  %s11 = sld [smem:[#allocation0]]
  $region89: #{boring_encoder_block.2} parent=0
    _
  %s13 = ssub.s32 1, %s11
  %s14 = scalar_select 0, %s13, %s11
  $region1: #{boring_encoder_block.2} parent=0
    #allocation3 [shape = 'u8[8192]{0}', space=vmem, size = 0x2000, scoped, tag = 'input window, operand 0']
    #allocation4 [shape = 's32[2]{0}', space=sflag, size = 0x8, scoped, tag = 'scoped memory for boring_encoder_block.2']
    #allocation5 [shape = 'u8[8192]{0}', space=vmem, size = 0x2000, scoped, tag = 'input window, operand 1']
    #allocation6 [shape = 's32[2]{0}', space=sflag, size = 0x8, scoped, tag = 'scoped memory for boring_encoder_block.2']
    #allocation7 [shape = 'u8[8192]{0}', space=vmem, size = 0x2000, scoped, tag = 'input window, operand 4, single buffered']
    #allocation8 [shape = 'u8[8192]{0}', space=vmem, size = 0x2000, scoped, tag = 'input window, operand 6, single buffered']
    #allocation9 [shape = 's32[1]{0}', space=sflag, size = 0x4, scoped, tag = 'scoped memory for boring_encoder_block.2']
    %15 = vsyncpa [#allocation4], 0
    %s16 = scalar_lea.sflag [#allocation4], 1
    %17 = vsyncpa %s16, 0
    %18 = vsyncpa [#allocation6], 0
    %s19 = scalar_lea.sflag [#allocation6], 1
    %20 = vsyncpa %s19, 0
    %21 = vsyncpa [#allocation9], 0
    loop: start=0, step=1, limit=4
    $region2: #{boring_encoder_block.2} parent=1 // loop_pre_header
      _
    $region3: #{boring_encoder_block.2} parent=1 // loop_header
      %s23 = sphi 0, %s27
      %p24 = scmp.ge.s32.totalorder %s23, 4
      %s30 = sphi 0, %s42
      %s31 = sphi 0, %s38
      %s32 = sphi 0, %s30
      %s33 = sphi 0, %s31
      %s34 = sphi 0, %s32
      %s35 = sphi 0, %s33
      %s47 = sphi 0, %s49
      %s50 = sphi 0, %s47
      %s51 = sphi 0, %s50
      %s67 = sphi 0, %s51
      %s73 = sphi 0, %s75
      %s76 = sphi 0, %s73
      %s77 = sphi 0, %s76
      %s93 = sphi 0, %s77
      %s97 = sphi 0, %s97
      %s99 = sphi 0, %s97
      %s100 = sphi 0, %s99
      %s114 = sphi 0, %s100
      %s118 = sphi 0, %s118
      %s120 = sphi 0, %s118
      %s121 = sphi 0, %s120
      %s135 = sphi 0, %s121
      %s139 = sphi 0, %s139
      %s141 = sphi 0, %s139
      %s142 = sphi 0, %s141
      %s156 = sphi 0, %s142
      %s160 = sphi 0, %s160
      %s162 = sphi 0, %s160
      %s163 = sphi 0, %s162
      %s177 = sphi 0, %s163
      %s181 = sphi 0, %s181
      %s183 = sphi 0, %s181
      %s184 = sphi 0, %s183
      %s198 = sphi 0, %s184
      %s202 = sphi 0, %s202
      %s204 = sphi 0, %s202
      %s205 = sphi 0, %s204
      %s219 = sphi 0, %s205
      %s223 = sphi 0, %s223
      %s225 = sphi 0, %s223
      %s226 = sphi 0, %s225
      %s240 = sphi 0, %s226
      %s244 = sphi 0, %s244
      %s246 = sphi 0, %s244
      %s247 = sphi 0, %s246
      %s261 = sphi 0, %s247
      %s269 = sphi 0, %s271
      %s272 = sphi 0, %s269
      %s273 = sphi 0, %s272
      %s289 = sphi 0, %s273
    $region4: #{boring_encoder_block.2} parent=1 // loop_header_branch
      %26 = sbr.rel (%p24) target = $region8
    $region5: #{boring_encoder_block.2} parent=1 // loop_body
      %s28 = ssub.s32 %s23, 1
      %s29 = ssub.s32 %s23, 2
      %s36 = sadd.s32 1, %s31
      %p37 = scmp.ge.s32.totalorder %s36, 1
      %s38 = scalar_select %p37, 0, %s36
      %s39 = sadd.s32 1, %s30
      %s40 = scalar_select %p37, %s39, %s30
      %p41 = scmp.ge.s32.totalorder %s40, 2
      %s42 = scalar_select %p41, 0, %s40
      %s43 = ssub.s32 %s30, %s42
      %s44 = ssub.s32 %s31, %s38
      %s45 = sor.u32 %s43, %s44
      %p46 = scmp.eq.s32.totalorder %s45, 0
      %s48 = sadd.s32 %s47, 1
      %s49 = scalar_select %p46, %s47, %s48
      %p52 = pneg %p46
      %p53 = scmp.eq.s32.totalorder %s23, 1
      %p54 = por %p52, %p53
      %p55 = scmp.ne.s32.totalorder %s47, %s50
      %p56 = scmp.eq.s32.totalorder %s23, 0
      %p57 = por %p55, %p56
      %p58 = scmp.ne.s32.totalorder %s47, %s50
      %p59 = scmp.eq.s32.totalorder %s28, 1
      %p60 = por %p58, %p59
      %p61 = scmp.ne.s32.totalorder %s50, %s51
      %p62 = scmp.eq.s32.totalorder %s28, 0
      %p63 = por %p61, %p62
      %p64 = scmp.ne.s32.totalorder %s50, %s51
      %p65 = scmp.eq.s32.totalorder %s29, 1
      %p66 = por %p64, %p65
      %p68 = scmp.ne.s32.totalorder %s51, %s67
      %p69 = scmp.eq.s32.totalorder %s29, 0
      %p70 = por %p68, %p69
      %s71 = ssub.s32 %s30, %s42
      %p72 = scmp.eq.s32.totalorder %s71, 0
      %s74 = sadd.s32 %s73, 1
      %s75 = scalar_select %p72, %s73, %s74
      %p78 = pneg %p72
      %p79 = scmp.eq.s32.totalorder %s23, 1
      %p80 = por %p78, %p79
      %p81 = scmp.ne.s32.totalorder %s73, %s76
      %p82 = scmp.eq.s32.totalorder %s23, 0
      %p83 = por %p81, %p82
      %p84 = scmp.ne.s32.totalorder %s73, %s76
      %p85 = scmp.eq.s32.totalorder %s28, 1
      %p86 = por %p84, %p85
      %p87 = scmp.ne.s32.totalorder %s76, %s77
      %p88 = scmp.eq.s32.totalorder %s28, 0
      %p89 = por %p87, %p88
      %p90 = scmp.ne.s32.totalorder %s76, %s77
      %p91 = scmp.eq.s32.totalorder %s29, 1
      %p92 = por %p90, %p91
      %p94 = scmp.ne.s32.totalorder %s77, %s93
      %p95 = scmp.eq.s32.totalorder %s29, 0
      %p96 = por %p94, %p95
      %s98 = sadd.s32 %s97, 1
      %p101 = scmp.eq.s32.totalorder %s23, 1
      %p102 = scmp.ne.s32.totalorder %s97, %s99
      %p103 = scmp.eq.s32.totalorder %s23, 0
      %p104 = por %p102, %p103
      %p105 = scmp.ne.s32.totalorder %s97, %s99
      %p106 = scmp.eq.s32.totalorder %s28, 1
      %p107 = por %p105, %p106
      %p108 = scmp.ne.s32.totalorder %s99, %s100
      %p109 = scmp.eq.s32.totalorder %s28, 0
      %p110 = por %p108, %p109
      %p111 = scmp.ne.s32.totalorder %s99, %s100
      %p112 = scmp.eq.s32.totalorder %s29, 1
      %p113 = por %p111, %p112
      %p115 = scmp.ne.s32.totalorder %s100, %s114
      %p116 = scmp.eq.s32.totalorder %s29, 0
      %p117 = por %p115, %p116
      %s119 = sadd.s32 %s118, 1
      %p122 = scmp.eq.s32.totalorder %s23, 1
      %p123 = scmp.ne.s32.totalorder %s118, %s120
      %p124 = scmp.eq.s32.totalorder %s23, 0
      %p125 = por %p123, %p124
      %p126 = scmp.ne.s32.totalorder %s118, %s120
      %p127 = scmp.eq.s32.totalorder %s28, 1
      %p128 = por %p126, %p127
      %p129 = scmp.ne.s32.totalorder %s120, %s121
      %p130 = scmp.eq.s32.totalorder %s28, 0
      %p131 = por %p129, %p130
      %p132 = scmp.ne.s32.totalorder %s120, %s121
      %p133 = scmp.eq.s32.totalorder %s29, 1
      %p134 = por %p132, %p133
      %p136 = scmp.ne.s32.totalorder %s121, %s135
      %p137 = scmp.eq.s32.totalorder %s29, 0
      %p138 = por %p136, %p137
      %s140 = sadd.s32 %s139, 1
      %p143 = scmp.eq.s32.totalorder %s23, 1
      %p144 = scmp.ne.s32.totalorder %s139, %s141
      %p145 = scmp.eq.s32.totalorder %s23, 0
      %p146 = por %p144, %p145
      %p147 = scmp.ne.s32.totalorder %s139, %s141
      %p148 = scmp.eq.s32.totalorder %s28, 1
      %p149 = por %p147, %p148
      %p150 = scmp.ne.s32.totalorder %s141, %s142
      %p151 = scmp.eq.s32.totalorder %s28, 0
      %p152 = por %p150, %p151
      %p153 = scmp.ne.s32.totalorder %s141, %s142
      %p154 = scmp.eq.s32.totalorder %s29, 1
      %p155 = por %p153, %p154
      %p157 = scmp.ne.s32.totalorder %s142, %s156
      %p158 = scmp.eq.s32.totalorder %s29, 0
      %p159 = por %p157, %p158
      %s161 = sadd.s32 %s160, 1
      %p164 = scmp.eq.s32.totalorder %s23, 1
      %p165 = scmp.ne.s32.totalorder %s160, %s162
      %p166 = scmp.eq.s32.totalorder %s23, 0
      %p167 = por %p165, %p166
      %p168 = scmp.ne.s32.totalorder %s160, %s162
      %p169 = scmp.eq.s32.totalorder %s28, 1
      %p170 = por %p168, %p169
      %p171 = scmp.ne.s32.totalorder %s162, %s163
      %p172 = scmp.eq.s32.totalorder %s28, 0
      %p173 = por %p171, %p172
      %p174 = scmp.ne.s32.totalorder %s162, %s163
      %p175 = scmp.eq.s32.totalorder %s29, 1
      %p176 = por %p174, %p175
      %p178 = scmp.ne.s32.totalorder %s163, %s177
      %p179 = scmp.eq.s32.totalorder %s29, 0
      %p180 = por %p178, %p179
      %s182 = sadd.s32 %s181, 1
      %p185 = scmp.eq.s32.totalorder %s23, 1
      %p186 = scmp.ne.s32.totalorder %s181, %s183
      %p187 = scmp.eq.s32.totalorder %s23, 0
      %p188 = por %p186, %p187
      %p189 = scmp.ne.s32.totalorder %s181, %s183
      %p190 = scmp.eq.s32.totalorder %s28, 1
      %p191 = por %p189, %p190
      %p192 = scmp.ne.s32.totalorder %s183, %s184
      %p193 = scmp.eq.s32.totalorder %s28, 0
      %p194 = por %p192, %p193
      %p195 = scmp.ne.s32.totalorder %s183, %s184
      %p196 = scmp.eq.s32.totalorder %s29, 1
      %p197 = por %p195, %p196
      %p199 = scmp.ne.s32.totalorder %s184, %s198
      %p200 = scmp.eq.s32.totalorder %s29, 0
      %p201 = por %p199, %p200
      %s203 = sadd.s32 %s202, 1
      %p206 = scmp.eq.s32.totalorder %s23, 1
      %p207 = scmp.ne.s32.totalorder %s202, %s204
      %p208 = scmp.eq.s32.totalorder %s23, 0
      %p209 = por %p207, %p208
      %p210 = scmp.ne.s32.totalorder %s202, %s204
      %p211 = scmp.eq.s32.totalorder %s28, 1
      %p212 = por %p210, %p211
      %p213 = scmp.ne.s32.totalorder %s204, %s205
      %p214 = scmp.eq.s32.totalorder %s28, 0
      %p215 = por %p213, %p214
      %p216 = scmp.ne.s32.totalorder %s204, %s205
      %p217 = scmp.eq.s32.totalorder %s29, 1
      %p218 = por %p216, %p217
      %p220 = scmp.ne.s32.totalorder %s205, %s219
      %p221 = scmp.eq.s32.totalorder %s29, 0
      %p222 = por %p220, %p221
      %s224 = sadd.s32 %s223, 1
      %p227 = scmp.eq.s32.totalorder %s23, 1
      %p228 = scmp.ne.s32.totalorder %s223, %s225
      %p229 = scmp.eq.s32.totalorder %s23, 0
      %p230 = por %p228, %p229
      %p231 = scmp.ne.s32.totalorder %s223, %s225
      %p232 = scmp.eq.s32.totalorder %s28, 1
      %p233 = por %p231, %p232
      %p234 = scmp.ne.s32.totalorder %s225, %s226
      %p235 = scmp.eq.s32.totalorder %s28, 0
      %p236 = por %p234, %p235
      %p237 = scmp.ne.s32.totalorder %s225, %s226
      %p238 = scmp.eq.s32.totalorder %s29, 1
      %p239 = por %p237, %p238
      %p241 = scmp.ne.s32.totalorder %s226, %s240
      %p242 = scmp.eq.s32.totalorder %s29, 0
      %p243 = por %p241, %p242
      %s245 = sadd.s32 %s244, 1
      %p248 = scmp.eq.s32.totalorder %s23, 1
      %p249 = scmp.ne.s32.totalorder %s244, %s246
      %p250 = scmp.eq.s32.totalorder %s23, 0
      %p251 = por %p249, %p250
      %p252 = scmp.ne.s32.totalorder %s244, %s246
      %p253 = scmp.eq.s32.totalorder %s28, 1
      %p254 = por %p252, %p253
      %p255 = scmp.ne.s32.totalorder %s246, %s247
      %p256 = scmp.eq.s32.totalorder %s28, 0
      %p257 = por %p255, %p256
      %p258 = scmp.ne.s32.totalorder %s246, %s247
      %p259 = scmp.eq.s32.totalorder %s29, 1
      %p260 = por %p258, %p259
      %p262 = scmp.ne.s32.totalorder %s247, %s261
      %p263 = scmp.eq.s32.totalorder %s29, 0
      %p264 = por %p262, %p263
      %s265 = ssub.s32 %s30, %s42
      %s266 = ssub.s32 %s31, %s38
      %s267 = sor.u32 %s265, %s266
      %p268 = scmp.eq.s32.totalorder %s267, 0
      %s270 = sadd.s32 %s269, 1
      %s271 = scalar_select %p268, %s269, %s270
      %p274 = pneg %p268
      %p275 = scmp.eq.s32.totalorder %s23, 1
      %p276 = por %p274, %p275
      %p277 = scmp.ne.s32.totalorder %s269, %s272
      %p278 = scmp.eq.s32.totalorder %s23, 0
      %p279 = por %p277, %p278
      %p280 = scmp.ne.s32.totalorder %s269, %s272
      %p281 = scmp.eq.s32.totalorder %s28, 1
      %p282 = por %p280, %p281
      %p283 = scmp.ne.s32.totalorder %s272, %s273
      %p284 = scmp.eq.s32.totalorder %s28, 0
      %p285 = por %p283, %p284
      %p286 = scmp.ne.s32.totalorder %s272, %s273
      %p287 = scmp.eq.s32.totalorder %s29, 1
      %p288 = por %p286, %p287
      %p290 = scmp.ne.s32.totalorder %s273, %s289
      %p291 = scmp.eq.s32.totalorder %s29, 0
      %p292 = por %p290, %p291
      %p293 = scmp.le.s32.totalorder 1, %s23
      %p294 = scmp.lt.s32.totalorder %s23, 3
      %p295 = pnand %p293, %p294
      %p296 = pneg %p295
      // Predicated region
      $region9: #{boring_encoder_block.2} parent=5 // pred_check
        _
      $region10: #{boring_encoder_block.2} parent=5 // pred_check_branch
        %298 = sbr.rel (%p295) target = $region12
      $region11: #{boring_encoder_block.2} parent=5 // pred_region
        %s299 = ssub.s32 %s23, 1
        // Predicated region
        $region13: #{boring_encoder_block.2} parent=11 // pred_check
          %p300 = pneg %p110
        $region14: #{boring_encoder_block.2} parent=11 // pred_check_branch
          %302 = sbr.rel (%p300) target = $region16
        $region15: #{boring_encoder_block.2} parent=11 // pred_region
          _
        $region16: #{boring_encoder_block.2} parent=11 // pred_fallthru
          _
        // Predicated region
        $region17: #{boring_encoder_block.2} parent=11 // pred_check
          %p303 = pneg %p131
        $region18: #{boring_encoder_block.2} parent=11 // pred_check_branch
          %305 = sbr.rel (%p303) target = $region20
        $region19: #{boring_encoder_block.2} parent=11 // pred_region
          _
        $region20: #{boring_encoder_block.2} parent=11 // pred_fallthru
          _
        // Predicated region
        $region21: #{boring_encoder_block.2} parent=11 // pred_check
          %p306 = pneg %p152
        $region22: #{boring_encoder_block.2} parent=11 // pred_check_branch
          %308 = sbr.rel (%p306) target = $region24
        $region23: #{boring_encoder_block.2} parent=11 // pred_region
          %s310 = ssub.s32 256, 256
          %311 = vsyncadd [#allocation6], %s310
          %s312 = sshll.u32 [#allocation7], 4
          %s313 = int_to_ptr.vmem [resolvable:$true] %s312
          %318 = dma.hbm_to_vmem [thread:$0]  %s4, 256, %s313, [#allocation6], 64, 64, 4
        $region24: #{boring_encoder_block.2} parent=11 // pred_fallthru
          _
        // Predicated region
        $region25: #{boring_encoder_block.2} parent=11 // pred_check
          %p319 = pneg %p173
        $region26: #{boring_encoder_block.2} parent=11 // pred_check_branch
          %321 = sbr.rel (%p319) target = $region28
        $region27: #{boring_encoder_block.2} parent=11 // pred_region
          _
        $region28: #{boring_encoder_block.2} parent=11 // pred_fallthru
          _
        // Predicated region
        $region29: #{boring_encoder_block.2} parent=11 // pred_check
          %p322 = pneg %p194
        $region30: #{boring_encoder_block.2} parent=11 // pred_check_branch
          %324 = sbr.rel (%p322) target = $region32
        $region31: #{boring_encoder_block.2} parent=11 // pred_region
          %s326 = ssub.s32 256, 256
          %327 = vsyncadd [#allocation9], %s326
          %s328 = sshll.u32 [#allocation8], 4
          %s329 = int_to_ptr.vmem [resolvable:$true] %s328
          %334 = dma.hbm_to_vmem [thread:$0]  %s6, 256, %s329, [#allocation9], 64, 64, 4
        $region32: #{boring_encoder_block.2} parent=11 // pred_fallthru
          _
        // Predicated region
        $region33: #{boring_encoder_block.2} parent=11 // pred_check
          %p335 = pneg %p215
        $region34: #{boring_encoder_block.2} parent=11 // pred_check_branch
          %337 = sbr.rel (%p335) target = $region36
        $region35: #{boring_encoder_block.2} parent=11 // pred_region
          _
        $region36: #{boring_encoder_block.2} parent=11 // pred_fallthru
          _
        // Predicated region
        $region37: #{boring_encoder_block.2} parent=11 // pred_check
          %p338 = pneg %p236
        $region38: #{boring_encoder_block.2} parent=11 // pred_check_branch
          %340 = sbr.rel (%p338) target = $region40
        $region39: #{boring_encoder_block.2} parent=11 // pred_region
          _
        $region40: #{boring_encoder_block.2} parent=11 // pred_fallthru
          _
        // Predicated region
        $region41: #{boring_encoder_block.2} parent=11 // pred_check
          %p341 = pneg %p257
        $region42: #{boring_encoder_block.2} parent=11 // pred_check_branch
          %343 = sbr.rel (%p341) target = $region44
        $region43: #{boring_encoder_block.2} parent=11 // pred_region
          _
        $region44: #{boring_encoder_block.2} parent=11 // pred_fallthru
          _
      $region12: #{boring_encoder_block.2} parent=5 // pred_fallthru
        _
      %p344 = scmp.lt.s32.totalorder %s23, 2
      // Predicated region
      $region45: #{boring_encoder_block.2} parent=5 // pred_check
        %p345 = pneg %p344
      $region46: #{boring_encoder_block.2} parent=5 // pred_check_branch
        %347 = sbr.rel (%p345) target = $region48
      $region47: #{boring_encoder_block.2} parent=5 // pred_region
        // Predicated region
        $region49: #{boring_encoder_block.2} parent=47 // pred_check
          %p348 = pneg %p57
        $region50: #{boring_encoder_block.2} parent=47 // pred_check_branch
          %350 = sbr.rel (%p348) target = $region52
        $region51: #{boring_encoder_block.2} parent=47 // pred_region
          %s351 = sand.u32 %s47, 1
          %s352 = scalar_lea.sflag [#allocation4], %s351
          %s353 = sand.u32 %s47, 1
          %s354 = smul.addr %s353, 8
          %s355 = scalar_lea.vmem [#allocation3], %s354
          %s357 = ssub.s32 128, 128
          %358 = vsyncadd %s352, %s357
          %s359 = sadd.s32 %s31, %s30
          %s360 = smul.addr %s359, 128
          %s361 = scalar_lea.hbm %s0, %s360
          %s363 = sshll.u32 %s355, 4
          %s364 = int_to_ptr.vmem [resolvable:$true] %s363
          %366 = dma.hbm_to_vmem [thread:$0]  %s361, 128, %s364, %s352
        $region52: #{boring_encoder_block.2} parent=47 // pred_fallthru
          _
        // Predicated region
        $region53: #{boring_encoder_block.2} parent=47 // pred_check
          %p367 = pneg %p83
        $region54: #{boring_encoder_block.2} parent=47 // pred_check_branch
          %369 = sbr.rel (%p367) target = $region56
        $region55: #{boring_encoder_block.2} parent=47 // pred_region
          %s370 = sand.u32 %s23, 1
          %s371 = scalar_lea.sflag [#allocation6], %s370
          %s372 = sand.u32 %s73, 1
          %s373 = smul.addr %s372, 8
          %s374 = scalar_lea.vmem [#allocation5], %s373
          %s376 = ssub.s32 128, 128
          %377 = vsyncadd %s371, %s376
          %s378 = smul.addr %s30, 128
          %s379 = scalar_lea.hbm %s1, %s378
          %s381 = sshll.u32 %s374, 4
          %s382 = int_to_ptr.vmem [resolvable:$true] %s381
          %384 = dma.hbm_to_vmem [thread:$0]  %s379, 128, %s382, %s371
        $region56: #{boring_encoder_block.2} parent=47 // pred_fallthru
          _
      $region48: #{boring_encoder_block.2} parent=5 // pred_fallthru
        _
      %p385 = scmp.le.s32.totalorder 1, %s23
      %p386 = scmp.lt.s32.totalorder %s23, 3
      %p387 = pnand %p385, %p386
      %p388 = pneg %p387
      // Predicated region
      $region57: #{boring_encoder_block.2} parent=5 // pred_check
        _
      $region58: #{boring_encoder_block.2} parent=5 // pred_check_branch
        %390 = sbr.rel (%p387) target = $region60
      $region59: #{boring_encoder_block.2} parent=5 // pred_region
        %s391 = ssub.s32 %s23, 1
        %s392 = sand.u32 %s50, 1
        %s393 = scalar_lea.sflag [#allocation4], %s392
        %s394 = sand.u32 %s50, 1
        %s395 = smul.addr %s394, 8
        %s396 = scalar_lea.vmem [#allocation3], %s395
        // Predicated region
        $region61: #{boring_encoder_block.2} parent=59 // pred_check
          %p397 = pneg %p63
        $region62: #{boring_encoder_block.2} parent=59 // pred_check_branch
          %399 = sbr.rel (%p397) target = $region64
        $region63: #{boring_encoder_block.2} parent=59 // pred_region
          %400 = dma.done %s393, 128
        $region64: #{boring_encoder_block.2} parent=59 // pred_fallthru
          _
        %s401 = sand.u32 %s28, 1
        %s402 = scalar_lea.sflag [#allocation6], %s401
        %s403 = sand.u32 %s76, 1
        %s404 = smul.addr %s403, 8
        %s405 = scalar_lea.vmem [#allocation5], %s404
        // Predicated region
        $region65: #{boring_encoder_block.2} parent=59 // pred_check
          %p406 = pneg %p89
        $region66: #{boring_encoder_block.2} parent=59 // pred_check_branch
          %408 = sbr.rel (%p406) target = $region68
        $region67: #{boring_encoder_block.2} parent=59 // pred_region
          %409 = dma.done %s402, 128
        $region68: #{boring_encoder_block.2} parent=59 // pred_fallthru
          _
        // Predicated region
        $region69: #{boring_encoder_block.2} parent=59 // pred_check
          %p410 = pneg %p152
        $region70: #{boring_encoder_block.2} parent=59 // pred_check_branch
          %412 = sbr.rel (%p410) target = $region72
        $region71: #{boring_encoder_block.2} parent=59 // pred_region
          %413 = dma.done [#allocation6], 256
        $region72: #{boring_encoder_block.2} parent=59 // pred_fallthru
          _
        // Predicated region
        $region73: #{boring_encoder_block.2} parent=59 // pred_check
          %p414 = pneg %p194
        $region74: #{boring_encoder_block.2} parent=59 // pred_check_branch
          %416 = sbr.rel (%p414) target = $region76
        $region75: #{boring_encoder_block.2} parent=59 // pred_region
          %417 = dma.done [#allocation9], 256
        $region76: #{boring_encoder_block.2} parent=59 // pred_fallthru
          _
        %s418 = sand.u32 %s50, 1
        %s419 = scalar_lea.sflag [#allocation4], %s418
        %s420 = sand.u32 %s50, 1
        %s421 = smul.addr %s420, 8
        %s422 = scalar_lea.vmem [#allocation3], %s421
        %p423 = pneg %p63
        %p424 = pneg %p60
        %s425 = sand.u32 %s28, 1
        %s426 = scalar_lea.sflag [#allocation6], %s425
        %s427 = sand.u32 %s76, 1
        %s428 = smul.addr %s427, 8
        %s429 = scalar_lea.vmem [#allocation5], %s428
        %p430 = pneg %p89
        %p431 = pneg %p86
        %p432 = pneg %p110
        %p433 = pneg %p107
        %p434 = pneg %p131
        %p435 = pneg %p128
        %p436 = pneg %p152
        %p437 = pneg %p149
        %p438 = pneg %p173
        %p439 = pneg %p170
        %p440 = pneg %p194
        %p441 = pneg %p191
        %p442 = pneg %p215
        %p443 = pneg %p212
        %p444 = pneg %p236
        %p445 = pneg %p233
        %p446 = pneg %p257
        %p447 = pneg %p254
        %p448 = pneg %p285
        %p449 = pneg %p282
        %p450 = scmp.lt.s32.totalorder %s32, 1
        %s451 = scalar_select %p450, %s32, 1
        %p452 = scmp.lt.s32.totalorder %s33, 0
        %s453 = scalar_select %p452, %s33, 0
        %s454 = sadd.s32 %s453, %s451
        %s455 = smul.addr %s454, 8
        %s456 = scalar_lea.vmem %s10, %s455
        %p457 = scmp.lt.s32.totalorder %s32, 1
        %s458 = scalar_select %p457, %s32, 1
        %p459 = scmp.lt.s32.totalorder %s33, 0
        %s460 = scalar_select %p459, %s33, 0
        %s461 = sadd.s32 %s460, %s458
        %s462 = smul.addr %s461, 8
        %s463 = scalar_lea.vmem %s10, %s462
        %v465 = vld [vmem:[%s396] sm:$0xff]
        %v466 = vld [vmem:[%s405] sm:$0xff]
        %v467 = vpack.c.bf16 %v465, %v465
        %v468 = vld [vmem:[%s2] sm:$0xf]
        %v469 = vld [vmem:[%s2 + $0x4] sm:$0xf]
        %v470 = vld [vmem:[%s2 + $0x8] sm:$0xf]
        %v471 = vld [vmem:[%s2 + $0xc] sm:$0xf]
        %v472 = vld [vmem:[%s3] sm:$0x1]
        %v474 = vlaneseq
        %v475 = vshrl.u32 %v474, 7
        %v476 = vsub.s32 0, %v475
        %v477 = vrot.slane %v472, %v476
        %v483 = vunpack.c.l.b16 %v468
        %v484 = vunpack.c.l.b16 %v469
        %v485 = vunpack.c.l.b16 %v470
        %v486 = vunpack.c.l.b16 %v471
        %v487 = vpack.c.b16 %v484, %v483
        %v488 = vpack.c.b16 %v486, %v485
        %vm491 = vcmask 261120
        %v493 = vsel %vm491, %v467, 0
        %495 = vmatprep.subr.bf16.mxu0 0
        %496 = vmatpush1.bf16.msra.mxu0 0
        %497 = vmatprep.subr.bf16.mxu0 0
        %498 = vmatpush1.bf16.msra.mxu0 0
        %499 = vmatprep.subr.bf16.mxu0 0
        %500 = vmatpush1.bf16.msra.mxu0 0
        %501 = vmatprep.subr.bf16.mxu0 0
        %502 = vmatpush1.bf16.msra.mxu0 0
        %503 = vmatprep.subr.bf16.mxu0 0
        %504 = vmatpush1.bf16.msra.mxu0 0
        %505 = vmatprep.subr.bf16.mxu0 0
        %506 = vmatpush1.bf16.msra.mxu0 0
        %507 = vmatprep.subr.bf16.mxu0 0
        %508 = vmatpush1.bf16.msra.mxu0 %v488
        %509 = vmatprep.subr.bf16.mxu0 0
        %510 = vmatpush1.bf16.msra.mxu0 %v487
        %511 = vmatprep.subr.bf16.mxu0 0
        %512 = vmatpush2.bf16.msra.mxu0 0
        %513 = vmatprep.subr.bf16.mxu0 0
        %514 = vmatpush2.bf16.msra.mxu0 0
        %515 = vmatprep.subr.bf16.mxu0 0
        %516 = vmatpush2.bf16.msra.mxu0 0
        %517 = vmatprep.subr.bf16.mxu0 0
        %518 = vmatpush2.bf16.msra.mxu0 0
        %519 = vmatprep.subr.bf16.mxu0 0
        %520 = vmatpush2.bf16.msra.mxu0 0
        %521 = vmatprep.subr.bf16.mxu0 0
        %522 = vmatpush2.bf16.msra.mxu0 0
        %523 = vmatprep.subr.bf16.mxu0 0
        %524 = vmatpush2.bf16.msra.mxu0 0
        %525 = vmatprep.subr.bf16.mxu0 0
        %526 = vmatpush2.bf16.msra.mxu0 0
        %527 = vmatprep.mubr.bf16.mxu0 0
        %528 = vmatmul.mubr.bf16.gmra.mxu0 %v493
        %v529 = vpop.f32.mrf.mxu0
        %v530 = vadd.f32 %v477, %v529
        %v531 = vpop.f32.mrf.mxu0
        %v532 = vpop.f32.mrf.mxu0
        %v533 = vpop.f32.mrf.mxu0
        %534 = vdwg.mxu0
        %v535 = vmul.f32 %v530, 0.35355338
        %v536 = vpack.c.bf16 %v535, %v535
        %v537 = vpack.c.bf16 %v466, %v466
        %v538 = vld [vmem:[#allocation7] sm:$0xf]
        %v539 = vld [vmem:[#allocation7 + $0x4] sm:$0xf]
        %v540 = vld [vmem:[#allocation7 + $0x8] sm:$0xf]
        %v541 = vld [vmem:[#allocation7 + $0xc] sm:$0xf]
        %v542 = vld [vmem:[%s5] sm:$0x1]
        %v544 = vlaneseq
        %v545 = vshrl.u32 %v544, 7
        %v546 = vsub.s32 0, %v545
        %v547 = vrot.slane %v542, %v546
        %v553 = vunpack.c.l.b16 %v538
        %v554 = vunpack.c.l.b16 %v539
        %v555 = vunpack.c.l.b16 %v540
        %v556 = vunpack.c.l.b16 %v541
        %v557 = vpack.c.b16 %v554, %v553
        %v558 = vpack.c.b16 %v556, %v555
        %v562 = vsel %vm491, %v537, 0
        %564 = vmatprep.subr.bf16.mxu0 0
        %565 = vmatpush1.bf16.msra.mxu0 0
        %566 = vmatprep.subr.bf16.mxu0 0
        %567 = vmatpush1.bf16.msra.mxu0 0
        %568 = vmatprep.subr.bf16.mxu0 0
        %569 = vmatpush1.bf16.msra.mxu0 0
        %570 = vmatprep.subr.bf16.mxu0 0
        %571 = vmatpush1.bf16.msra.mxu0 0
        %572 = vmatprep.subr.bf16.mxu0 0
        %573 = vmatpush1.bf16.msra.mxu0 0
        %574 = vmatprep.subr.bf16.mxu0 0
        %575 = vmatpush1.bf16.msra.mxu0 0
        %576 = vmatprep.subr.bf16.mxu0 0
        %577 = vmatpush1.bf16.msra.mxu0 %v558
        %578 = vmatprep.subr.bf16.mxu0 0
        %579 = vmatpush1.bf16.msra.mxu0 %v557
        %580 = vmatprep.subr.bf16.mxu0 0
        %581 = vmatpush2.bf16.msra.mxu0 0
        %582 = vmatprep.subr.bf16.mxu0 0
        %583 = vmatpush2.bf16.msra.mxu0 0
        %584 = vmatprep.subr.bf16.mxu0 0
        %585 = vmatpush2.bf16.msra.mxu0 0
        %586 = vmatprep.subr.bf16.mxu0 0
        %587 = vmatpush2.bf16.msra.mxu0 0
        %588 = vmatprep.subr.bf16.mxu0 0
        %589 = vmatpush2.bf16.msra.mxu0 0
        %590 = vmatprep.subr.bf16.mxu0 0
        %591 = vmatpush2.bf16.msra.mxu0 0
        %592 = vmatprep.subr.bf16.mxu0 0
        %593 = vmatpush2.bf16.msra.mxu0 0
        %594 = vmatprep.subr.bf16.mxu0 0
        %595 = vmatpush2.bf16.msra.mxu0 0
        %596 = vmatprep.mubr.bf16.mxu0 0
        %597 = vmatmul.mubr.bf16.gmra.mxu0 %v562
        %v598 = vpop.f32.mrf.mxu0
        %v599 = vadd.f32 %v547, %v598
        %v600 = vpop.f32.mrf.mxu0
        %v601 = vpop.f32.mrf.mxu0
        %v602 = vpop.f32.mrf.mxu0
        %603 = vdwg.mxu0
        %v604 = vpack.c.bf16 %v599, %v599
        %vm605 = vcmask 64512
        %v607 = vsel %vm605, %v536, 0
        %v610 = vsel %vm605, %v604, 0
        %612 = vmatprep.subr.bf16.mxu0 0
        %613 = vmatpush1.bf16.xpose.msra.mxu0 0
        %614 = vmatprep.subr.bf16.mxu0 0
        %615 = vmatpush1.bf16.xpose.msra.mxu0 0
        %616 = vmatprep.subr.bf16.mxu0 0
        %617 = vmatpush1.bf16.xpose.msra.mxu0 0
        %618 = vmatprep.subr.bf16.mxu0 0
        %619 = vmatpush1.bf16.xpose.msra.mxu0 0
        %620 = vmatprep.subr.bf16.mxu0 0
        %621 = vmatpush1.bf16.xpose.msra.mxu0 0
        %622 = vmatprep.subr.bf16.mxu0 0
        %623 = vmatpush1.bf16.xpose.msra.mxu0 0
        %624 = vmatprep.subr.bf16.mxu0 0
        %625 = vmatpush1.bf16.xpose.msra.mxu0 0
        %626 = vmatprep.subr.bf16.mxu0 0
        %627 = vmatpush1.bf16.xpose.msra.mxu0 %v610
        %628 = vmatprep.subr.bf16.mxu0 0
        %629 = vmatpush2.bf16.xpose.msra.mxu0 0
        %630 = vmatprep.subr.bf16.mxu0 0
        %631 = vmatpush2.bf16.xpose.msra.mxu0 0
        %632 = vmatprep.subr.bf16.mxu0 0
        %633 = vmatpush2.bf16.xpose.msra.mxu0 0
        %634 = vmatprep.subr.bf16.mxu0 0
        %635 = vmatpush2.bf16.xpose.msra.mxu0 0
        %636 = vmatprep.subr.bf16.mxu0 0
        %637 = vmatpush2.bf16.xpose.msra.mxu0 0
        %638 = vmatprep.subr.bf16.mxu0 0
        %639 = vmatpush2.bf16.xpose.msra.mxu0 0
        %640 = vmatprep.subr.bf16.mxu0 0
        %641 = vmatpush2.bf16.xpose.msra.mxu0 0
        %642 = vmatprep.subr.bf16.mxu0 0
        %643 = vmatpush2.bf16.xpose.msra.mxu0 0
        %644 = vmatprep.mubr.bf16.mxu0 0
        %645 = vmatmul.mubr.bf16.gmra.mxu0 %v607
        %v646 = vpop.f32.mrf.mxu0
        %v647 = vadd.f32 0.0, %v646
        %v648 = vpop.f32.mrf.mxu0
        %v649 = vpop.f32.mrf.mxu0
        %v650 = vpop.f32.mrf.mxu0
        %651 = vdwg.mxu0
        %v652 = vsel %vm605, %v647, -inf
        %653 = vmax.xlane.f32.xlu0 %v652
        %v654 = vpop.xlane.xlu0 %653
        %v655 = vsub.f32 %v647, %v654
        %v656 = vmul.f32 %v655, 1.442695
        %v657 = vpow.pop %v656
        %v658 = vsel %vm605, %v657, 0.0
        %659 = vadd.xlane.f32.xlu0 %v658
        %v660 = vpop.xlane.xlu0 %659
        %v661 = vpack.c.bf16 %v657, %v657
        %663 = vrot.lane.b32.xlu0 %v604, 96
        %v664 = vpop.permute.xlu0 %663
        %v666 = vsel %vm605, %v661, 0
        %vm668 = vcmask 1043456
        %v670 = vsel %vm668, %v664, 0
        %672 = vmatprep.subr.bf16.mxu0 0
        %673 = vmatpush1.bf16.msra.mxu0 0
        %674 = vmatprep.subr.bf16.mxu0 0
        %675 = vmatpush1.bf16.msra.mxu0 0
        %676 = vmatprep.subr.bf16.mxu0 0
        %677 = vmatpush1.bf16.msra.mxu0 0
        %678 = vmatprep.subr.bf16.mxu0 0
        %679 = vmatpush1.bf16.msra.mxu0 0
        %680 = vmatprep.subr.bf16.mxu0 0
        %681 = vmatpush1.bf16.msra.mxu0 0
        %682 = vmatprep.subr.bf16.mxu0 0
        %683 = vmatpush1.bf16.msra.mxu0 0
        %684 = vmatprep.subr.bf16.mxu0 0
        %685 = vmatpush1.bf16.msra.mxu0 0
        %686 = vmatprep.subr.bf16.mxu0 0
        %687 = vmatpush1.bf16.msra.mxu0 %v670
        %688 = vmatprep.subr.bf16.mxu0 0
        %689 = vmatpush2.bf16.msra.mxu0 0
        %690 = vmatprep.subr.bf16.mxu0 0
        %691 = vmatpush2.bf16.msra.mxu0 0
        %692 = vmatprep.subr.bf16.mxu0 0
        %693 = vmatpush2.bf16.msra.mxu0 0
        %694 = vmatprep.subr.bf16.mxu0 0
        %695 = vmatpush2.bf16.msra.mxu0 0
        %696 = vmatprep.subr.bf16.mxu0 0
        %697 = vmatpush2.bf16.msra.mxu0 0
        %698 = vmatprep.subr.bf16.mxu0 0
        %699 = vmatpush2.bf16.msra.mxu0 0
        %700 = vmatprep.subr.bf16.mxu0 0
        %701 = vmatpush2.bf16.msra.mxu0 0
        %702 = vmatprep.subr.bf16.mxu0 0
        %703 = vmatpush2.bf16.msra.mxu0 0
        %704 = vmatprep.mubr.bf16.mxu0 0
        %705 = vmatmul.mubr.bf16.gmra.mxu0 %v666
        %v706 = vpop.f32.mrf.mxu0
        %v707 = vadd.f32 0.0, %v706
        %v708 = vpop.f32.mrf.mxu0
        %v709 = vpop.f32.mrf.mxu0
        %v710 = vpop.f32.mrf.mxu0
        %711 = vdwg.mxu0
        %v712 = vrcp.pop %v660
        %v713 = vmul.f32 %v707, %v712
        %715 = vrot.lane.b32.xlu0 %v536, 120
        %v716 = vpop.permute.xlu0 %715
        %717 = vrot.lane.b32.xlu0 %v604, 120
        %v718 = vpop.permute.xlu0 %717
        %v720 = vsel %vm605, %v716, 0
        %v723 = vsel %vm605, %v718, 0
        %725 = vmatprep.subr.bf16.mxu0 0
        %726 = vmatpush1.bf16.xpose.msra.mxu0 0
        %727 = vmatprep.subr.bf16.mxu0 0
        %728 = vmatpush1.bf16.xpose.msra.mxu0 0
        %729 = vmatprep.subr.bf16.mxu0 0
        %730 = vmatpush1.bf16.xpose.msra.mxu0 0
        %731 = vmatprep.subr.bf16.mxu0 0
        %732 = vmatpush1.bf16.xpose.msra.mxu0 0
        %733 = vmatprep.subr.bf16.mxu0 0
        %734 = vmatpush1.bf16.xpose.msra.mxu0 0
        %735 = vmatprep.subr.bf16.mxu0 0
        %736 = vmatpush1.bf16.xpose.msra.mxu0 0
        %737 = vmatprep.subr.bf16.mxu0 0
        %738 = vmatpush1.bf16.xpose.msra.mxu0 0
        %739 = vmatprep.subr.bf16.mxu0 0
        %740 = vmatpush1.bf16.xpose.msra.mxu0 %v723
        %741 = vmatprep.subr.bf16.mxu0 0
        %742 = vmatpush2.bf16.xpose.msra.mxu0 0
        %743 = vmatprep.subr.bf16.mxu0 0
        %744 = vmatpush2.bf16.xpose.msra.mxu0 0
        %745 = vmatprep.subr.bf16.mxu0 0
        %746 = vmatpush2.bf16.xpose.msra.mxu0 0
        %747 = vmatprep.subr.bf16.mxu0 0
        %748 = vmatpush2.bf16.xpose.msra.mxu0 0
        %749 = vmatprep.subr.bf16.mxu0 0
        %750 = vmatpush2.bf16.xpose.msra.mxu0 0
        %751 = vmatprep.subr.bf16.mxu0 0
        %752 = vmatpush2.bf16.xpose.msra.mxu0 0
        %753 = vmatprep.subr.bf16.mxu0 0
        %754 = vmatpush2.bf16.xpose.msra.mxu0 0
        %755 = vmatprep.subr.bf16.mxu0 0
        %756 = vmatpush2.bf16.xpose.msra.mxu0 0
        %757 = vmatprep.mubr.bf16.mxu0 0
        %758 = vmatmul.mubr.bf16.gmra.mxu0 %v720
        %v759 = vpop.f32.mrf.mxu0
        %v760 = vadd.f32 0.0, %v759
        %v761 = vpop.f32.mrf.mxu0
        %v762 = vpop.f32.mrf.mxu0
        %v763 = vpop.f32.mrf.mxu0
        %764 = vdwg.mxu0
        %v765 = vsel %vm605, %v760, -inf
        %766 = vmax.xlane.f32.xlu0 %v765
        %v767 = vpop.xlane.xlu0 %766
        %v768 = vsub.f32 %v760, %v767
        %v769 = vmul.f32 %v768, 1.442695
        %v770 = vpow.pop %v769
        %v771 = vsel %vm605, %v770, 0.0
        %772 = vadd.xlane.f32.xlu0 %v771
        %v773 = vpop.xlane.xlu0 %772
        %v774 = vpack.c.bf16 %v770, %v770
        %775 = vrot.lane.b32.xlu0 %v604, 88
        %v776 = vpop.permute.xlu0 %775
        %v778 = vsel %vm605, %v774, 0
        %v781 = vsel %vm668, %v776, 0
        %783 = vmatprep.subr.bf16.mxu0 0
        %784 = vmatpush1.bf16.msra.mxu0 0
        %785 = vmatprep.subr.bf16.mxu0 0
        %786 = vmatpush1.bf16.msra.mxu0 0
        %787 = vmatprep.subr.bf16.mxu0 0
        %788 = vmatpush1.bf16.msra.mxu0 0
        %789 = vmatprep.subr.bf16.mxu0 0
        %790 = vmatpush1.bf16.msra.mxu0 0
        %791 = vmatprep.subr.bf16.mxu0 0
        %792 = vmatpush1.bf16.msra.mxu0 0
        %793 = vmatprep.subr.bf16.mxu0 0
        %794 = vmatpush1.bf16.msra.mxu0 0
        %795 = vmatprep.subr.bf16.mxu0 0
        %796 = vmatpush1.bf16.msra.mxu0 0
        %797 = vmatprep.subr.bf16.mxu0 0
        %798 = vmatpush1.bf16.msra.mxu0 %v781
        %799 = vmatprep.subr.bf16.mxu0 0
        %800 = vmatpush2.bf16.msra.mxu0 0
        %801 = vmatprep.subr.bf16.mxu0 0
        %802 = vmatpush2.bf16.msra.mxu0 0
        %803 = vmatprep.subr.bf16.mxu0 0
        %804 = vmatpush2.bf16.msra.mxu0 0
        %805 = vmatprep.subr.bf16.mxu0 0
        %806 = vmatpush2.bf16.msra.mxu0 0
        %807 = vmatprep.subr.bf16.mxu0 0
        %808 = vmatpush2.bf16.msra.mxu0 0
        %809 = vmatprep.subr.bf16.mxu0 0
        %810 = vmatpush2.bf16.msra.mxu0 0
        %811 = vmatprep.subr.bf16.mxu0 0
        %812 = vmatpush2.bf16.msra.mxu0 0
        %813 = vmatprep.subr.bf16.mxu0 0
        %814 = vmatpush2.bf16.msra.mxu0 0
        %815 = vmatprep.mubr.bf16.mxu0 0
        %816 = vmatmul.mubr.bf16.gmra.mxu0 %v778
        %v817 = vpop.f32.mrf.mxu0
        %v818 = vadd.f32 0.0, %v817
        %v819 = vpop.f32.mrf.mxu0
        %v820 = vpop.f32.mrf.mxu0
        %v821 = vpop.f32.mrf.mxu0
        %822 = vdwg.mxu0
        %v823 = vrcp.pop %v773
        %v824 = vmul.f32 %v818, %v823
        %825 = vrot.lane.b32.xlu0 %v536, 112
        %v826 = vpop.permute.xlu0 %825
        %827 = vrot.lane.b32.xlu0 %v604, 112
        %v828 = vpop.permute.xlu0 %827
        %v830 = vsel %vm605, %v826, 0
        %v833 = vsel %vm605, %v828, 0
        %835 = vmatprep.subr.bf16.mxu0 0
        %836 = vmatpush1.bf16.xpose.msra.mxu0 0
        %837 = vmatprep.subr.bf16.mxu0 0
        %838 = vmatpush1.bf16.xpose.msra.mxu0 0
        %839 = vmatprep.subr.bf16.mxu0 0
        %840 = vmatpush1.bf16.xpose.msra.mxu0 0
        %841 = vmatprep.subr.bf16.mxu0 0
        %842 = vmatpush1.bf16.xpose.msra.mxu0 0
        %843 = vmatprep.subr.bf16.mxu0 0
        %844 = vmatpush1.bf16.xpose.msra.mxu0 0
        %845 = vmatprep.subr.bf16.mxu0 0
        %846 = vmatpush1.bf16.xpose.msra.mxu0 0
        %847 = vmatprep.subr.bf16.mxu0 0
        %848 = vmatpush1.bf16.xpose.msra.mxu0 0
        %849 = vmatprep.subr.bf16.mxu0 0
        %850 = vmatpush1.bf16.xpose.msra.mxu0 %v833
        %851 = vmatprep.subr.bf16.mxu0 0
        %852 = vmatpush2.bf16.xpose.msra.mxu0 0
        %853 = vmatprep.subr.bf16.mxu0 0
        %854 = vmatpush2.bf16.xpose.msra.mxu0 0
        %855 = vmatprep.subr.bf16.mxu0 0
        %856 = vmatpush2.bf16.xpose.msra.mxu0 0
        %857 = vmatprep.subr.bf16.mxu0 0
        %858 = vmatpush2.bf16.xpose.msra.mxu0 0
        %859 = vmatprep.subr.bf16.mxu0 0
        %860 = vmatpush2.bf16.xpose.msra.mxu0 0
        %861 = vmatprep.subr.bf16.mxu0 0
        %862 = vmatpush2.bf16.xpose.msra.mxu0 0
        %863 = vmatprep.subr.bf16.mxu0 0
        %864 = vmatpush2.bf16.xpose.msra.mxu0 0
        %865 = vmatprep.subr.bf16.mxu0 0
        %866 = vmatpush2.bf16.xpose.msra.mxu0 0
        %867 = vmatprep.mubr.bf16.mxu0 0
        %868 = vmatmul.mubr.bf16.gmra.mxu0 %v830
        %v869 = vpop.f32.mrf.mxu0
        %v870 = vadd.f32 0.0, %v869
        %v871 = vpop.f32.mrf.mxu0
        %v872 = vpop.f32.mrf.mxu0
        %v873 = vpop.f32.mrf.mxu0
        %874 = vdwg.mxu0
        %v875 = vsel %vm605, %v870, -inf
        %876 = vmax.xlane.f32.xlu0 %v875
        %v877 = vpop.xlane.xlu0 %876
        %v878 = vsub.f32 %v870, %v877
        %v879 = vmul.f32 %v878, 1.442695
        %v880 = vpow.pop %v879
        %v881 = vsel %vm605, %v880, 0.0
        %882 = vadd.xlane.f32.xlu0 %v881
        %v883 = vpop.xlane.xlu0 %882
        %v884 = vpack.c.bf16 %v880, %v880
        %885 = vrot.lane.b32.xlu0 %v604, 80
        %v886 = vpop.permute.xlu0 %885
        %v888 = vsel %vm605, %v884, 0
        %v891 = vsel %vm668, %v886, 0
        %893 = vmatprep.subr.bf16.mxu0 0
        %894 = vmatpush1.bf16.msra.mxu0 0
        %895 = vmatprep.subr.bf16.mxu0 0
        %896 = vmatpush1.bf16.msra.mxu0 0
        %897 = vmatprep.subr.bf16.mxu0 0
        %898 = vmatpush1.bf16.msra.mxu0 0
        %899 = vmatprep.subr.bf16.mxu0 0
        %900 = vmatpush1.bf16.msra.mxu0 0
        %901 = vmatprep.subr.bf16.mxu0 0
        %902 = vmatpush1.bf16.msra.mxu0 0
        %903 = vmatprep.subr.bf16.mxu0 0
        %904 = vmatpush1.bf16.msra.mxu0 0
        %905 = vmatprep.subr.bf16.mxu0 0
        %906 = vmatpush1.bf16.msra.mxu0 0
        %907 = vmatprep.subr.bf16.mxu0 0
        %908 = vmatpush1.bf16.msra.mxu0 %v891
        %909 = vmatprep.subr.bf16.mxu0 0
        %910 = vmatpush2.bf16.msra.mxu0 0
        %911 = vmatprep.subr.bf16.mxu0 0
        %912 = vmatpush2.bf16.msra.mxu0 0
        %913 = vmatprep.subr.bf16.mxu0 0
        %914 = vmatpush2.bf16.msra.mxu0 0
        %915 = vmatprep.subr.bf16.mxu0 0
        %916 = vmatpush2.bf16.msra.mxu0 0
        %917 = vmatprep.subr.bf16.mxu0 0
        %918 = vmatpush2.bf16.msra.mxu0 0
        %919 = vmatprep.subr.bf16.mxu0 0
        %920 = vmatpush2.bf16.msra.mxu0 0
        %921 = vmatprep.subr.bf16.mxu0 0
        %922 = vmatpush2.bf16.msra.mxu0 0
        %923 = vmatprep.subr.bf16.mxu0 0
        %924 = vmatpush2.bf16.msra.mxu0 0
        %925 = vmatprep.mubr.bf16.mxu0 0
        %926 = vmatmul.mubr.bf16.gmra.mxu0 %v888
        %v927 = vpop.f32.mrf.mxu0
        %v928 = vadd.f32 0.0, %v927
        %v929 = vpop.f32.mrf.mxu0
        %v930 = vpop.f32.mrf.mxu0
        %v931 = vpop.f32.mrf.mxu0
        %932 = vdwg.mxu0
        %v933 = vrcp.pop %v883
        %v934 = vmul.f32 %v928, %v933
        %935 = vrot.lane.b32.xlu0 %v536, 104
        %v936 = vpop.permute.xlu0 %935
        %937 = vrot.lane.b32.xlu0 %v604, 104
        %v938 = vpop.permute.xlu0 %937
        %v940 = vsel %vm605, %v936, 0
        %v943 = vsel %vm605, %v938, 0
        %945 = vmatprep.subr.bf16.mxu0 0
        %946 = vmatpush1.bf16.xpose.msra.mxu0 0
        %947 = vmatprep.subr.bf16.mxu0 0
        %948 = vmatpush1.bf16.xpose.msra.mxu0 0
        %949 = vmatprep.subr.bf16.mxu0 0
        %950 = vmatpush1.bf16.xpose.msra.mxu0 0
        %951 = vmatprep.subr.bf16.mxu0 0
        %952 = vmatpush1.bf16.xpose.msra.mxu0 0
        %953 = vmatprep.subr.bf16.mxu0 0
        %954 = vmatpush1.bf16.xpose.msra.mxu0 0
        %955 = vmatprep.subr.bf16.mxu0 0
        %956 = vmatpush1.bf16.xpose.msra.mxu0 0
        %957 = vmatprep.subr.bf16.mxu0 0
        %958 = vmatpush1.bf16.xpose.msra.mxu0 0
        %959 = vmatprep.subr.bf16.mxu0 0
        %960 = vmatpush1.bf16.xpose.msra.mxu0 %v943
        %961 = vmatprep.subr.bf16.mxu0 0
        %962 = vmatpush2.bf16.xpose.msra.mxu0 0
        %963 = vmatprep.subr.bf16.mxu0 0
        %964 = vmatpush2.bf16.xpose.msra.mxu0 0
        %965 = vmatprep.subr.bf16.mxu0 0
        %966 = vmatpush2.bf16.xpose.msra.mxu0 0
        %967 = vmatprep.subr.bf16.mxu0 0
        %968 = vmatpush2.bf16.xpose.msra.mxu0 0
        %969 = vmatprep.subr.bf16.mxu0 0
        %970 = vmatpush2.bf16.xpose.msra.mxu0 0
        %971 = vmatprep.subr.bf16.mxu0 0
        %972 = vmatpush2.bf16.xpose.msra.mxu0 0
        %973 = vmatprep.subr.bf16.mxu0 0
        %974 = vmatpush2.bf16.xpose.msra.mxu0 0
        %975 = vmatprep.subr.bf16.mxu0 0
        %976 = vmatpush2.bf16.xpose.msra.mxu0 0
        %977 = vmatprep.mubr.bf16.mxu0 0
        %978 = vmatmul.mubr.bf16.gmra.mxu0 %v940
        %v979 = vpop.f32.mrf.mxu0
        %v980 = vadd.f32 0.0, %v979
        %v981 = vpop.f32.mrf.mxu0
        %v982 = vpop.f32.mrf.mxu0
        %v983 = vpop.f32.mrf.mxu0
        %984 = vdwg.mxu0
        %v985 = vsel %vm605, %v980, -inf
        %986 = vmax.xlane.f32.xlu0 %v985
        %v987 = vpop.xlane.xlu0 %986
        %v988 = vsub.f32 %v980, %v987
        %v989 = vmul.f32 %v988, 1.442695
        %v990 = vpow.pop %v989
        %v991 = vsel %vm605, %v990, 0.0
        %992 = vadd.xlane.f32.xlu0 %v991
        %v993 = vpop.xlane.xlu0 %992
        %v994 = vpack.c.bf16 %v990, %v990
        %995 = vrot.lane.b32.xlu0 %v604, 72
        %v996 = vpop.permute.xlu0 %995
        %v998 = vsel %vm605, %v994, 0
        %v1001 = vsel %vm668, %v996, 0
        %1003 = vmatprep.subr.bf16.mxu0 0
        %1004 = vmatpush1.bf16.msra.mxu0 0
        %1005 = vmatprep.subr.bf16.mxu0 0
        %1006 = vmatpush1.bf16.msra.mxu0 0
        %1007 = vmatprep.subr.bf16.mxu0 0
        %1008 = vmatpush1.bf16.msra.mxu0 0
        %1009 = vmatprep.subr.bf16.mxu0 0
        %1010 = vmatpush1.bf16.msra.mxu0 0
        %1011 = vmatprep.subr.bf16.mxu0 0
        %1012 = vmatpush1.bf16.msra.mxu0 0
        %1013 = vmatprep.subr.bf16.mxu0 0
        %1014 = vmatpush1.bf16.msra.mxu0 0
        %1015 = vmatprep.subr.bf16.mxu0 0
        %1016 = vmatpush1.bf16.msra.mxu0 0
        %1017 = vmatprep.subr.bf16.mxu0 0
        %1018 = vmatpush1.bf16.msra.mxu0 %v1001
        %1019 = vmatprep.subr.bf16.mxu0 0
        %1020 = vmatpush2.bf16.msra.mxu0 0
        %1021 = vmatprep.subr.bf16.mxu0 0
        %1022 = vmatpush2.bf16.msra.mxu0 0
        %1023 = vmatprep.subr.bf16.mxu0 0
        %1024 = vmatpush2.bf16.msra.mxu0 0
        %1025 = vmatprep.subr.bf16.mxu0 0
        %1026 = vmatpush2.bf16.msra.mxu0 0
        %1027 = vmatprep.subr.bf16.mxu0 0
        %1028 = vmatpush2.bf16.msra.mxu0 0
        %1029 = vmatprep.subr.bf16.mxu0 0
        %1030 = vmatpush2.bf16.msra.mxu0 0
        %1031 = vmatprep.subr.bf16.mxu0 0
        %1032 = vmatpush2.bf16.msra.mxu0 0
        %1033 = vmatprep.subr.bf16.mxu0 0
        %1034 = vmatpush2.bf16.msra.mxu0 0
        %1035 = vmatprep.mubr.bf16.mxu0 0
        %1036 = vmatmul.mubr.bf16.gmra.mxu0 %v998
        %v1037 = vpop.f32.mrf.mxu0
        %v1038 = vadd.f32 0.0, %v1037
        %v1039 = vpop.f32.mrf.mxu0
        %v1040 = vpop.f32.mrf.mxu0
        %v1041 = vpop.f32.mrf.mxu0
        %1042 = vdwg.mxu0
        %v1043 = vrcp.pop %v993
        %v1044 = vmul.f32 %v1038, %v1043
        %1046 = vrot.lane.b32.xlu0 %v824, 8
        %v1047 = vpop.permute.xlu0 %1046
        %1050 = vrot.lane.b32.xlu0 %v934, 16
        %v1051 = vpop.permute.xlu0 %1050
        %1054 = vrot.lane.b32.xlu0 %v1044, 24
        %v1055 = vpop.permute.xlu0 %1054
        %v1057 = vsel %vm605, %v713, %v1047
        %vm1058 = vcmask 130048
        %v1059 = vsel %vm1058, %v1057, %v1051
        %vm1060 = vcmask 195584
        %v1061 = vsel %vm1060, %v1059, %v1055
        %v1062 = vpack.c.bf16 %v1061, %v1061
        %vm1063 = vcmask 257024
        %1064 = vst.msk [vmem:[#allocation2] sm:$0xf] %vm1063, %v1062
        %v1065 = vld [vmem:[#allocation2] sm:$0xf]
        %v1066 = vld [vmem:[#allocation8] sm:$0xf]
        %v1067 = vld [vmem:[#allocation8 + $0x4] sm:$0xf]
        %v1068 = vld [vmem:[#allocation8 + $0x8] sm:$0xf]
        %v1069 = vld [vmem:[#allocation8 + $0xc] sm:$0xf]
        %v1070 = vld [vmem:[%s7] sm:$0x1]
        %v1072 = vlaneseq
        %v1073 = vshrl.u32 %v1072, 7
        %v1074 = vsub.s32 0, %v1073
        %v1075 = vrot.slane %v1070, %v1074
        %v1081 = vunpack.c.l.b16 %v1066
        %v1082 = vunpack.c.l.b16 %v1067
        %v1083 = vunpack.c.l.b16 %v1068
        %v1084 = vunpack.c.l.b16 %v1069
        %v1085 = vpack.c.b16 %v1082, %v1081
        %v1086 = vpack.c.b16 %v1084, %v1083
        %v1090 = vsel %vm491, %v1065, 0
        %1092 = vmatprep.subr.bf16.mxu0 0
        %1093 = vmatpush1.bf16.msra.mxu0 0
        %1094 = vmatprep.subr.bf16.mxu0 0
        %1095 = vmatpush1.bf16.msra.mxu0 0
        %1096 = vmatprep.subr.bf16.mxu0 0
        %1097 = vmatpush1.bf16.msra.mxu0 0
        %1098 = vmatprep.subr.bf16.mxu0 0
        %1099 = vmatpush1.bf16.msra.mxu0 0
        %1100 = vmatprep.subr.bf16.mxu0 0
        %1101 = vmatpush1.bf16.msra.mxu0 0
        %1102 = vmatprep.subr.bf16.mxu0 0
        %1103 = vmatpush1.bf16.msra.mxu0 0
        %1104 = vmatprep.subr.bf16.mxu0 0
        %1105 = vmatpush1.bf16.msra.mxu0 %v1086
        %1106 = vmatprep.subr.bf16.mxu0 0
        %1107 = vmatpush1.bf16.msra.mxu0 %v1085
        %1108 = vmatprep.subr.bf16.mxu0 0
        %1109 = vmatpush2.bf16.msra.mxu0 0
        %1110 = vmatprep.subr.bf16.mxu0 0
        %1111 = vmatpush2.bf16.msra.mxu0 0
        %1112 = vmatprep.subr.bf16.mxu0 0
        %1113 = vmatpush2.bf16.msra.mxu0 0
        %1114 = vmatprep.subr.bf16.mxu0 0
        %1115 = vmatpush2.bf16.msra.mxu0 0
        %1116 = vmatprep.subr.bf16.mxu0 0
        %1117 = vmatpush2.bf16.msra.mxu0 0
        %1118 = vmatprep.subr.bf16.mxu0 0
        %1119 = vmatpush2.bf16.msra.mxu0 0
        %1120 = vmatprep.subr.bf16.mxu0 0
        %1121 = vmatpush2.bf16.msra.mxu0 0
        %1122 = vmatprep.subr.bf16.mxu0 0
        %1123 = vmatpush2.bf16.msra.mxu0 0
        %1124 = vmatprep.mubr.bf16.mxu0 0
        %1125 = vmatmul.mubr.bf16.gmra.mxu0 %v1090
        %v1126 = vpop.f32.mrf.mxu0
        %v1127 = vadd.f32 %v1075, %v1126
        %v1128 = vpop.f32.mrf.mxu0
        %v1129 = vpop.f32.mrf.mxu0
        %v1130 = vpop.f32.mrf.mxu0
        %1131 = vdwg.mxu0
        %v1132 = vadd.f32 %v1127, %v465
        %v1133 = vsel %vm491, %v1132, 0.0
        %1134 = vadd.xlane.f32.xlu0 %v1133
        %v1135 = vpop.xlane.xlu0 %1134
        %v1136 = vrcp.pop 32.0
        %v1137 = vmul.f32 %v1135, %v1136
        %v1138 = vsub.f32 %v1132, %v1137
        %v1139 = vmul.f32 %v1138, %v1138
        %v1140 = vsel %vm491, %v1139, 0.0
        %1141 = vadd.xlane.f32.xlu0 %v1140
        %v1142 = vpop.xlane.xlu0 %1141
        %v1143 = vmul.f32 %v1142, %v1136
        %v1144 = vadd.f32 %v1143, 1e-05
        %v1145 = vrsqrt.pop %v1144
        %v1146 = vmul.f32 %v1138, %v1145
        %v1147 = vld [vmem:[%s8] sm:$0x1]
        %v1149 = vlaneseq
        %v1150 = vshrl.u32 %v1149, 7
        %v1151 = vsub.s32 0, %v1150
        %v1152 = vrot.slane %v1147, %v1151
        %v1154 = vmul.f32 %v1146, %v1152
        %v1155 = vld [vmem:[%s9] sm:$0x1]
        %v1157 = vlaneseq
        %v1158 = vshrl.u32 %v1157, 7
        %v1159 = vsub.s32 0, %v1158
        %v1160 = vrot.slane %v1155, %v1159
        %v1162 = vadd.f32 %v1154, %v1160
        %1163 = vst.msk [vmem:[%s463] sm:$0xff] %vm491, %v1162
        %p1164 = scmp.lt.s32.totalorder %s32, 1
        %s1165 = scalar_select %p1164, %s32, 1
        %p1166 = scmp.lt.s32.totalorder %s33, 0
        %s1167 = scalar_select %p1166, %s33, 0
        %s1168 = sadd.s32 %s1167, %s1165
        %s1169 = smul.addr %s1168, 8
        %s1170 = scalar_lea.vmem %s10, %s1169
        // Predicated region
        $region77: #{boring_encoder_block.2} parent=59 // pred_check
          %p1171 = pneg %p282
        $region78: #{boring_encoder_block.2} parent=59 // pred_check_branch
          %1173 = sbr.rel (%p1171) target = $region80
        $region79: #{boring_encoder_block.2} parent=59 // pred_region
          _
        $region80: #{boring_encoder_block.2} parent=59 // pred_fallthru
          _
      $region60: #{boring_encoder_block.2} parent=5 // pred_fallthru
        _
      %p1174 = scmp.le.s32.totalorder 2, %s23
      // Predicated region
      $region81: #{boring_encoder_block.2} parent=5 // pred_check
        %p1175 = pneg %p1174
      $region82: #{boring_encoder_block.2} parent=5 // pred_check_branch
        %1177 = sbr.rel (%p1175) target = $region84
      $region83: #{boring_encoder_block.2} parent=5 // pred_region
        %s1178 = ssub.s32 %s23, 2
        // Predicated region
        $region85: #{boring_encoder_block.2} parent=83 // pred_check
          %p1179 = pneg %p288
        $region86: #{boring_encoder_block.2} parent=83 // pred_check_branch
          %1181 = sbr.rel (%p1179) target = $region88
        $region87: #{boring_encoder_block.2} parent=83 // pred_region
          %p1182 = scmp.lt.s32.totalorder %s34, 1
          %s1183 = scalar_select %p1182, %s34, 1
          %p1184 = scmp.lt.s32.totalorder %s35, 0
          %s1185 = scalar_select %p1184, %s35, 0
          %s1186 = sadd.s32 %s1185, %s1183
          %s1187 = smul.addr %s1186, 8
          %s1188 = scalar_lea.vmem %s10, %s1187
        $region88: #{boring_encoder_block.2} parent=83 // pred_fallthru
          _
      $region84: #{boring_encoder_block.2} parent=5 // pred_fallthru
        _
    $region6: #{boring_encoder_block.2} parent=1 // loop_footer
      %s27 = sadd.s32 1, %s23
    $region7: #{boring_encoder_block.2} parent=1 // loop_footer_branch
      %22 = sbr.rel target = $region3
    $region8: #{boring_encoder_block.2} parent=1 // loop_exit
      _
    %1189 = vsyncpa [#allocation4], 1
    %s1190 = scalar_lea.sflag [#allocation4], 1
    %1191 = vsyncpa %s1190, 1
    %1192 = vsyncpa [#allocation6], 1
    %s1193 = scalar_lea.sflag [#allocation6], 1
    %1194 = vsyncpa %s1193, 1
    %1195 = vsyncpa [#allocation9], 1

</llo_original>
